<compile_context>
chip_gen: v5e
topology: v5e:2x2
jax: 0.10.0
libtpu: 0.0.40
codegen_flags: <defaults>
</compile_context>

<pallas_src>
import jax
import jax.numpy as jnp
from jax.experimental import pallas as pl
from jax.experimental.pallas import tpu as pltpu

# ---------------- model hyper-parameters ------------------------------------
D_MODEL = 32
NHEAD = 4
HEAD_DIM = D_MODEL // NHEAD
DIM_FF = 64
NUM_LAYERS = 2
SEQ = 8
BATCH = 2
LN_EPS = 1e-5
N_TOK = SEQ * BATCH

# ---------------- packed parameter-slab layout -------------------------------
SLAB_W = max(2 * D_MODEL, DIM_FF)            # 64-lane wide slabs
LAYER_W_ROWS = 4 * D_MODEL + DIM_FF          # wqk|wv|wo|wff1 (32 rows each) + wff2 (64)
LAYER_V_ROWS = 9                             # bqk,bv,bo,bff1,bff2,ln1g,ln1b,ln2g,ln2b
W_ROWS = 2 * D_MODEL + NUM_LAYERS * LAYER_W_ROWS   # 448
V_ROWS = 2 + NUM_LAYERS * LAYER_V_ROWS             # 20

_VMEM = pl.BlockSpec(memory_space=pltpu.MemorySpace.VMEM)


# ---------------- single fused Pallas kernel --------------------------------
def _encoder_kernel(src_ref, pos_ref, w_ref, v_ref, *o_refs):
    """Whole NUM_LAYERS-layer encoder forward, fully VMEM resident."""
    kw_ref = o_refs[NUM_LAYERS]
    scale = 1.0 / (HEAD_DIM ** 0.5)

    def W(row, nrows, ncols):                 # weight matrix from the W slab
        return w_ref[row:row + nrows, 0:ncols]

    def V(row, ncols):                        # (1, ncols) bias / LN row
        return v_ref[row:row + 1, 0:ncols]

    def layernorm(x, g, b):
        mu = jnp.mean(x, axis=-1, keepdims=True)
        xc = x - mu
        var = jnp.mean(xc * xc, axis=-1, keepdims=True)
        return xc * jax.lax.rsqrt(var + LN_EPS) * g + b

    # (S, B, D) -> batch-major (N_TOK, D); row = b*SEQ + s  (aligned row concat)
    src = src_ref[...]
    posv = pos_ref[...]
    x = jnp.concatenate([src[:, b, :] for b in range(BATCH)], axis=0)
    pos = jnp.concatenate([posv[:, b, :] for b in range(BATCH)], axis=0)

    # query_scale MLP weights are shared across layers; load once.
    qs_w0 = W(0, D_MODEL, D_MODEL)
    qs_b0 = V(0, D_MODEL)
    qs_w1 = W(D_MODEL, D_MODEL, D_MODEL)
    qs_b1 = V(1, D_MODEL)

    def split_heads(mat, col0):
        # (N_TOK, *) cols [col0 + h*Dh, +Dh) per head -> (NHEAD*BATCH, S, Dh)
        hs = [mat[:, col0 + hd * HEAD_DIM: col0 + (hd + 1) * HEAD_DIM]
              .reshape(BATCH, SEQ, HEAD_DIM) for hd in range(NHEAD)]
        return jnp.stack(hs, axis=0).reshape(NHEAD * BATCH, SEQ, HEAD_DIM)

    for li in range(NUM_LAYERS):              # static unroll over layers
        wb = 2 * D_MODEL + li * LAYER_W_ROWS  # W-slab row base
        vb = 2 + li * LAYER_V_ROWS            # V-slab row base

        # ---- query_scale MLP on the running output ----
        h = jnp.maximum(
            jnp.dot(x, qs_w0, preferred_element_type=jnp.float32) + qs_b0, 0.0)
        pos_scales = jnp.dot(h, qs_w1, preferred_element_type=jnp.float32) + qs_b1

        # q = k = x + pos * pos_scales ; v = x
        qk_in = x + pos * pos_scales

        # ---- fused q|k projection (one (N,D)x(D,2D) matmul) + v projection ----
        qk_p = jnp.dot(qk_in, W(wb, D_MODEL, 2 * D_MODEL),
                       preferred_element_type=jnp.float32) + V(vb + 0, 2 * D_MODEL)
        v_p = jnp.dot(x, W(wb + D_MODEL, D_MODEL, D_MODEL),
                      preferred_element_type=jnp.float32) + V(vb + 1, D_MODEL)

        # ---- batched multi-head attention (all heads in one einsum) ----
        qh = split_heads(qk_p, 0)                    # (H*B, S, Dh)
        kh = split_heads(qk_p, D_MODEL)
        vh = split_heads(v_p, 0)

        s = jnp.einsum('xqd,xkd->xqk', qh, kh,
                       preferred_element_type=jnp.float32) * scale   # (H*B, S, S)
        m = jnp.max(s, axis=-1, keepdims=True)
        e = jnp.exp(s - m)
        p = e * pl.reciprocal(jnp.sum(e, axis=-1, keepdims=True), approx=True)

        # head-averaged attention weights, written directly as (B, S, S)
        kw_ref[li] = jnp.sum(p.reshape(NHEAD, BATCH, SEQ, SEQ), axis=0) * (1.0 / NHEAD)

        ctx = jnp.einsum('xqk,xkd->xqd', p, vh,
                         preferred_element_type=jnp.float32)          # (H*B, S, Dh)
        ctx4 = ctx.reshape(NHEAD, BATCH, SEQ, HEAD_DIM)
        ctx_flat = jnp.concatenate(
            [ctx4[hd].reshape(N_TOK, HEAD_DIM) for hd in range(NHEAD)], axis=1)

        # single K=32 out-projection over all heads / tokens
        attn = jnp.dot(ctx_flat, W(wb + 2 * D_MODEL, D_MODEL, D_MODEL),
                       preferred_element_type=jnp.float32) + V(vb + 2, D_MODEL)

        # ---- residual + norm1 ----
        x = layernorm(x + attn, V(vb + 5, D_MODEL), V(vb + 6, D_MODEL))

        # ---- FFN ----
        f = jnp.maximum(
            jnp.dot(x, W(wb + 3 * D_MODEL, D_MODEL, DIM_FF),
                    preferred_element_type=jnp.float32) + V(vb + 3, DIM_FF), 0.0)
        f = jnp.dot(f, W(wb + 4 * D_MODEL, DIM_FF, D_MODEL),
                    preferred_element_type=jnp.float32) + V(vb + 4, D_MODEL)

        # ---- residual + norm2 ----
        x = layernorm(x + f, V(vb + 7, D_MODEL), V(vb + 8, D_MODEL))

        # ---- per-layer output, written back in (S, B, D) order ----
        for b in range(BATCH):
            o_refs[li][:, b:b + 1, :] = (
                x[b * SEQ:(b + 1) * SEQ, :].reshape(SEQ, 1, D_MODEL))


# ---------------- parameter construction ------------------------------------
def init_params(key):
    """Raw (per-matrix) parameters; weights stored pre-transposed as (Din, Dout)."""
    def lin(k, din, dout):
        k1, k2 = jax.random.split(k)
        return (0.02 * jax.random.normal(k1, (din, dout), jnp.float32),
                0.02 * jax.random.normal(k2, (1, dout), jnp.float32))

    keys = jax.random.split(key, 2 + NUM_LAYERS)
    qs_w0, qs_b0 = lin(keys[0], D_MODEL, D_MODEL)
    qs_w1, qs_b1 = lin(keys[1], D_MODEL, D_MODEL)

    acc = {n: [] for n in ("wqk", "bqk", "wv", "bv", "wo", "bo",
                           "wff1", "bff1", "wff2", "bff2",
                           "ln1g", "ln1b", "ln2g", "ln2b")}
    for li in range(NUM_LAYERS):
        lk = jax.random.split(keys[2 + li], 6)
        wq, bq = lin(lk[0], D_MODEL, D_MODEL)
        wk, bk = lin(lk[1], D_MODEL, D_MODEL)
        acc["wqk"].append(jnp.concatenate([wq, wk], axis=1))   # (D, 2D) packed q|k
        acc["bqk"].append(jnp.concatenate([bq, bk], axis=1))   # (1, 2D)
        wv, bv = lin(lk[2], D_MODEL, D_MODEL)
        acc["wv"].append(wv); acc["bv"].append(bv)
        wo, bo = lin(lk[3], D_MODEL, D_MODEL)
        acc["wo"].append(wo); acc["bo"].append(bo)
        w1, b1 = lin(lk[4], D_MODEL, DIM_FF)
        acc["wff1"].append(w1); acc["bff1"].append(b1)
        w2, b2 = lin(lk[5], DIM_FF, D_MODEL)
        acc["wff2"].append(w2); acc["bff2"].append(b2)
        acc["ln1g"].append(jnp.ones((1, D_MODEL), jnp.float32))
        acc["ln1b"].append(jnp.zeros((1, D_MODEL), jnp.float32))
        acc["ln2g"].append(jnp.ones((1, D_MODEL), jnp.float32))
        acc["ln2b"].append(jnp.zeros((1, D_MODEL), jnp.float32))

    params = {"qs_w0": qs_w0, "qs_b0": qs_b0, "qs_w1": qs_w1, "qs_b1": qs_b1}
    for name, vals in acc.items():
        params[name] = jnp.stack(vals)     # leading NUM_LAYERS axis
    return params


def pack_params(p):
    """Pack all weights/biases into two VMEM slabs (done once, off the hot path)."""
    def pad(a):
        return jnp.pad(a, ((0, 0), (0, SLAB_W - a.shape[1])))

    w_rows = [pad(p["qs_w0"]), pad(p["qs_w1"])]
    v_rows = [pad(p["qs_b0"]), pad(p["qs_b1"])]
    for li in range(NUM_LAYERS):
        w_rows += [pad(p["wqk"][li]), pad(p["wv"][li]), pad(p["wo"][li]),
                   pad(p["wff1"][li]), pad(p["wff2"][li])]
        v_rows += [pad(p["bqk"][li]), pad(p["bv"][li]), pad(p["bo"][li]),
                   pad(p["bff1"][li]), pad(p["bff2"][li]),
                   pad(p["ln1g"][li]), pad(p["ln1b"][li]),
                   pad(p["ln2g"][li]), pad(p["ln2b"][li])]
    w_slab = jnp.concatenate(w_rows, axis=0)
    v_slab = jnp.concatenate(v_rows, axis=0)
    assert w_slab.shape == (W_ROWS, SLAB_W) and v_slab.shape == (V_ROWS, SLAB_W)
    return {"w": w_slab, "v": v_slab}


# ---------------- jitted forward (single pallas_call, no wrapper ops) --------
@jax.jit
def transformer_encoder_forward(packed, src, pos):
    """src, pos: (S, B, D). Returns ([ (S,B,D) ]*L, K_weights (L,B,S,S))."""
    outs = pl.pallas_call(
        _encoder_kernel,
        out_shape=tuple(
            [jax.ShapeDtypeStruct((SEQ, BATCH, D_MODEL), jnp.float32)] * NUM_LAYERS
            + [jax.ShapeDtypeStruct((NUM_LAYERS, BATCH, SEQ, SEQ), jnp.float32)]),
        in_specs=[_VMEM] * 4,
        out_specs=tuple([_VMEM] * (NUM_LAYERS + 1)),
    )(src, pos, packed["w"], packed["v"])
    inter_outputs = list(outs[:NUM_LAYERS])
    k_weights = outs[NUM_LAYERS]
    return inter_outputs, k_weights


# ---------------- pure-JAX reference (sanity check of the fused kernel) ------
def _reference_forward(params, src, pos):
    S, B, D = src.shape
    H, Dh = NHEAD, HEAD_DIM
    out = src
    pos_flat = pos.reshape(S * B, D)
    inter, kws = [], []
    for li in range(NUM_LAYERS):
        flat = out.reshape(S * B, D)
        h = jax.nn.relu(flat @ params["qs_w0"] + params["qs_b0"])
        ps = h @ params["qs_w1"] + params["qs_b1"]
        qk = flat + pos_flat * ps
        qk_p = qk @ params["wqk"][li] + params["bqk"][li]
        q, k = qk_p[:, :D], qk_p[:, D:]
        v = flat @ params["wv"][li] + params["bv"][li]

        def heads(t):
            return t.reshape(S, B, H, Dh).transpose(1, 2, 0, 3)   # (B,H,S,Dh)

        qh, kh, vh = heads(q), heads(k), heads(v)
        s = jnp.einsum('bhqd,bhkd->bhqk', qh, kh) * (1.0 / (Dh ** 0.5))
        p = jax.nn.softmax(s, axis=-1)
        ctx = jnp.einsum('bhqk,bhkd->bhqd', p, vh)
        ctx_f = ctx.transpose(2, 0, 1, 3).reshape(S * B, D)
        attn = ctx_f @ params["wo"][li] + params["bo"][li]

        def ln(x, g, b):
            mu = x.mean(-1, keepdims=True)
            var = ((x - mu) ** 2).mean(-1, keepdims=True)
            return (x - mu) * jax.lax.rsqrt(var + LN_EPS) * g + b

        x = ln(flat + attn, params["ln1g"][li], params["ln1b"][li])
        f = jax.nn.relu(x @ params["wff1"][li] + params["bff1"][li])
        f = f @ params["wff2"][li] + params["bff2"][li]
        x = ln(x + f, params["ln2g"][li], params["ln2b"][li])
        out = x.reshape(S, B, D)
        inter.append(out)
        kws.append(p.mean(axis=1))          # (B, S, S)
    return inter, jnp.stack(kws)


# ---------------- main -------------------------------------------------------
if __name__ == "__main__":
    key = jax.random.PRNGKey(0)
    kp, ks, kpos = jax.random.split(key, 3)

    params = init_params(kp)
    packed = pack_params(params)
    src = jax.random.normal(ks, (SEQ, BATCH, D_MODEL), jnp.float32)
    pos = jax.random.normal(kpos, (SEQ, BATCH, D_MODEL), jnp.float32)

    inter_outputs, k_weights = transformer_encoder_forward(packed, src, pos)
    for o in inter_outputs:
        jax.block_until_ready(o)
    jax.block_until_ready(k_weights)

    assert len(inter_outputs) == NUM_LAYERS
    assert inter_outputs[0].shape == (SEQ, BATCH, D_MODEL)
    assert k_weights.shape == (NUM_LAYERS, BATCH, SEQ, SEQ)

    # numerical sanity check against a plain-JAX f32 reference.
    # Tolerance is 2e-3 (vs 1e-3 before) because softmax normalization now uses
    # the approximate EUP reciprocal (pl.reciprocal(approx=True)).
    ref_inter, ref_kw = _reference_forward(params, src, pos)
    max_diff = 0.0
    for a, b in zip(inter_outputs, ref_inter):
        max_diff = max(max_diff, float(jnp.max(jnp.abs(a - b))))
    max_diff = max(max_diff, float(jnp.max(jnp.abs(k_weights - ref_kw))))
    assert max_diff < 2e-3, f"kernel/reference mismatch: {max_diff}"

    print("KERNEL_OK")
</pallas_src>

<mosaic_0001>
module attributes {stable_mosaic.version = 11 : i64} {
  func.func @_encoder_kernel(%arg0: memref<8x2x32xf32, #tpu.memory_space<vmem>>, %arg1: memref<8x2x32xf32, #tpu.memory_space<vmem>>, %arg2: memref<448x64xf32, #tpu.memory_space<vmem>>, %arg3: memref<20x64xf32, #tpu.memory_space<vmem>>, %arg4: memref<8x2x32xf32, #tpu.memory_space<vmem>>, %arg5: memref<8x2x32xf32, #tpu.memory_space<vmem>>, %arg6: memref<2x2x8x8xf32, #tpu.memory_space<vmem>>) attributes {dimension_semantics = [], scalar_prefetch = 0 : i64, scratch_operands = 0 : i64, tpu.core_type = #tpu.core_type<tc>} {
    %c0 = arith.constant 0 : index
    %c0_0 = arith.constant 0 : index
    %c0_1 = arith.constant 0 : index
    %0 = vector.load %arg0[%c0, %c0_0, %c0_1] : memref<8x2x32xf32, #tpu.memory_space<vmem>>, vector<8x2x32xf32>
    %c0_2 = arith.constant 0 : index
    %c0_3 = arith.constant 0 : index
    %c0_4 = arith.constant 0 : index
    %1 = vector.load %arg1[%c0_2, %c0_3, %c0_4] : memref<8x2x32xf32, #tpu.memory_space<vmem>>, vector<8x2x32xf32>
    %2 = vector.extract_strided_slice %0 {offsets = [0, 0, 0], sizes = [8, 1, 32], strides = [1, 1, 1]} : vector<8x2x32xf32> to vector<8x1x32xf32>
    %3 = vector.shape_cast %2 : vector<8x1x32xf32> to vector<8x32xf32>
    %4 = vector.extract_strided_slice %0 {offsets = [0, 1, 0], sizes = [8, 1, 32], strides = [1, 1, 1]} : vector<8x2x32xf32> to vector<8x1x32xf32>
    %5 = vector.shape_cast %4 : vector<8x1x32xf32> to vector<8x32xf32>
    %6 = tpu.concatenate %3, %5 in 0 : vector<8x32xf32>, vector<8x32xf32> -> vector<16x32xf32>
    %7 = vector.extract_strided_slice %1 {offsets = [0, 0, 0], sizes = [8, 1, 32], strides = [1, 1, 1]} : vector<8x2x32xf32> to vector<8x1x32xf32>
    %8 = vector.shape_cast %7 : vector<8x1x32xf32> to vector<8x32xf32>
    %9 = vector.extract_strided_slice %1 {offsets = [0, 1, 0], sizes = [8, 1, 32], strides = [1, 1, 1]} : vector<8x2x32xf32> to vector<8x1x32xf32>
    %10 = vector.shape_cast %9 : vector<8x1x32xf32> to vector<8x32xf32>
    %11 = tpu.concatenate %8, %10 in 0 : vector<8x32xf32>, vector<8x32xf32> -> vector<16x32xf32>
    %c0_5 = arith.constant 0 : index
    %c0_6 = arith.constant 0 : index
    %12 = vector.load %arg2[%c0_5, %c0_6] : memref<448x64xf32, #tpu.memory_space<vmem>>, vector<32x32xf32>
    %c0_7 = arith.constant 0 : index
    %c0_8 = arith.constant 0 : index
    %13 = vector.load %arg3[%c0_7, %c0_8] : memref<20x64xf32, #tpu.memory_space<vmem>>, vector<1x32xf32>
    %c32 = arith.constant 32 : index
    %c0_9 = arith.constant 0 : index
    %14 = vector.load %arg2[%c32, %c0_9] : memref<448x64xf32, #tpu.memory_space<vmem>>, vector<32x32xf32>
    %c1 = arith.constant 1 : index
    %c0_10 = arith.constant 0 : index
    %15 = vector.load %arg3[%c1, %c0_10] : memref<20x64xf32, #tpu.memory_space<vmem>>, vector<1x32xf32>
    %cst = arith.constant dense<0.000000e+00> : vector<16x32xf32>
    %16 = tpu.matmul %6, %12, %cst {dimension_numbers = #tpu.dot_dimension_numbers<[1], [0], [0], [1], [0, 0, 1, 1], [], []>} : vector<16x32xf32>, vector<32x32xf32>, vector<16x32xf32> -> vector<16x32xf32>
    %17 = vector.broadcast %13 : vector<1x32xf32> to vector<16x32xf32>
    %18 = arith.addf %16, %17 : vector<16x32xf32>
    %cst_11 = arith.constant 0.000000e+00 : f32
    %19 = vector.broadcast %cst_11 : f32 to vector<16x32xf32>
    %20 = arith.maximumf %18, %19 : vector<16x32xf32>
    %cst_12 = arith.constant dense<0.000000e+00> : vector<16x32xf32>
    %21 = tpu.matmul %20, %14, %cst_12 {dimension_numbers = #tpu.dot_dimension_numbers<[1], [0], [0], [1], [0, 0, 1, 1], [], []>} : vector<16x32xf32>, vector<32x32xf32>, vector<16x32xf32> -> vector<16x32xf32>
    %22 = vector.broadcast %15 : vector<1x32xf32> to vector<16x32xf32>
    %23 = arith.addf %21, %22 : vector<16x32xf32>
    %24 = arith.mulf %11, %23 : vector<16x32xf32>
    %25 = arith.addf %6, %24 : vector<16x32xf32>
    %c64 = arith.constant 64 : index
    %c0_13 = arith.constant 0 : index
    %26 = vector.load %arg2[%c64, %c0_13] : memref<448x64xf32, #tpu.memory_space<vmem>>, vector<32x64xf32>
    %cst_14 = arith.constant dense<0.000000e+00> : vector<16x64xf32>
    %27 = tpu.matmul %25, %26, %cst_14 {dimension_numbers = #tpu.dot_dimension_numbers<[1], [0], [0], [1], [0, 0, 1, 1], [], []>} : vector<16x32xf32>, vector<32x64xf32>, vector<16x64xf32> -> vector<16x64xf32>
    %c2 = arith.constant 2 : index
    %c0_15 = arith.constant 0 : index
    %28 = vector.load %arg3[%c2, %c0_15] : memref<20x64xf32, #tpu.memory_space<vmem>>, vector<1x64xf32>
    %29 = vector.broadcast %28 : vector<1x64xf32> to vector<16x64xf32>
    %30 = arith.addf %27, %29 : vector<16x64xf32>
    %c96 = arith.constant 96 : index
    %c0_16 = arith.constant 0 : index
    %31 = vector.load %arg2[%c96, %c0_16] : memref<448x64xf32, #tpu.memory_space<vmem>>, vector<32x32xf32>
    %cst_17 = arith.constant dense<0.000000e+00> : vector<16x32xf32>
    %32 = tpu.matmul %6, %31, %cst_17 {dimension_numbers = #tpu.dot_dimension_numbers<[1], [0], [0], [1], [0, 0, 1, 1], [], []>} : vector<16x32xf32>, vector<32x32xf32>, vector<16x32xf32> -> vector<16x32xf32>
    %c3 = arith.constant 3 : index
    %c0_18 = arith.constant 0 : index
    %33 = vector.load %arg3[%c3, %c0_18] : memref<20x64xf32, #tpu.memory_space<vmem>>, vector<1x32xf32>
    %34 = vector.broadcast %33 : vector<1x32xf32> to vector<16x32xf32>
    %35 = arith.addf %32, %34 : vector<16x32xf32>
    %36 = vector.extract_strided_slice %30 {offsets = [0, 0], sizes = [16, 8], strides = [1, 1]} : vector<16x64xf32> to vector<16x8xf32>
    %37 = vector.shape_cast %36 : vector<16x8xf32> to vector<2x8x8xf32>
    %38 = vector.extract_strided_slice %30 {offsets = [0, 8], sizes = [16, 8], strides = [1, 1]} : vector<16x64xf32> to vector<16x8xf32>
    %39 = vector.shape_cast %38 : vector<16x8xf32> to vector<2x8x8xf32>
    %40 = vector.extract_strided_slice %30 {offsets = [0, 16], sizes = [16, 8], strides = [1, 1]} : vector<16x64xf32> to vector<16x8xf32>
    %41 = vector.shape_cast %40 : vector<16x8xf32> to vector<2x8x8xf32>
    %42 = vector.extract_strided_slice %30 {offsets = [0, 24], sizes = [16, 8], strides = [1, 1]} : vector<16x64xf32> to vector<16x8xf32>
    %43 = vector.shape_cast %42 : vector<16x8xf32> to vector<2x8x8xf32>
    %44 = vector.shape_cast %37 : vector<2x8x8xf32> to vector<1x2x8x8xf32>
    %45 = vector.shape_cast %39 : vector<2x8x8xf32> to vector<1x2x8x8xf32>
    %46 = vector.shape_cast %41 : vector<2x8x8xf32> to vector<1x2x8x8xf32>
    %47 = vector.shape_cast %43 : vector<2x8x8xf32> to vector<1x2x8x8xf32>
    %48 = tpu.concatenate %44, %45, %46, %47 in 0 : vector<1x2x8x8xf32>, vector<1x2x8x8xf32>, vector<1x2x8x8xf32>, vector<1x2x8x8xf32> -> vector<4x2x8x8xf32>
    %49 = vector.shape_cast %48 : vector<4x2x8x8xf32> to vector<8x8x8xf32>
    %50 = vector.extract_strided_slice %30 {offsets = [0, 32], sizes = [16, 8], strides = [1, 1]} : vector<16x64xf32> to vector<16x8xf32>
    %51 = vector.shape_cast %50 : vector<16x8xf32> to vector<2x8x8xf32>
    %52 = vector.extract_strided_slice %30 {offsets = [0, 40], sizes = [16, 8], strides = [1, 1]} : vector<16x64xf32> to vector<16x8xf32>
    %53 = vector.shape_cast %52 : vector<16x8xf32> to vector<2x8x8xf32>
    %54 = vector.extract_strided_slice %30 {offsets = [0, 48], sizes = [16, 8], strides = [1, 1]} : vector<16x64xf32> to vector<16x8xf32>
    %55 = vector.shape_cast %54 : vector<16x8xf32> to vector<2x8x8xf32>
    %56 = vector.extract_strided_slice %30 {offsets = [0, 56], sizes = [16, 8], strides = [1, 1]} : vector<16x64xf32> to vector<16x8xf32>
    %57 = vector.shape_cast %56 : vector<16x8xf32> to vector<2x8x8xf32>
    %58 = vector.shape_cast %51 : vector<2x8x8xf32> to vector<1x2x8x8xf32>
    %59 = vector.shape_cast %53 : vector<2x8x8xf32> to vector<1x2x8x8xf32>
    %60 = vector.shape_cast %55 : vector<2x8x8xf32> to vector<1x2x8x8xf32>
    %61 = vector.shape_cast %57 : vector<2x8x8xf32> to vector<1x2x8x8xf32>
    %62 = tpu.concatenate %58, %59, %60, %61 in 0 : vector<1x2x8x8xf32>, vector<1x2x8x8xf32>, vector<1x2x8x8xf32>, vector<1x2x8x8xf32> -> vector<4x2x8x8xf32>
    %63 = vector.shape_cast %62 : vector<4x2x8x8xf32> to vector<8x8x8xf32>
    %64 = vector.extract_strided_slice %35 {offsets = [0, 0], sizes = [16, 8], strides = [1, 1]} : vector<16x32xf32> to vector<16x8xf32>
    %65 = vector.shape_cast %64 : vector<16x8xf32> to vector<2x8x8xf32>
    %66 = vector.extract_strided_slice %35 {offsets = [0, 8], sizes = [16, 8], strides = [1, 1]} : vector<16x32xf32> to vector<16x8xf32>
    %67 = vector.shape_cast %66 : vector<16x8xf32> to vector<2x8x8xf32>
    %68 = vector.extract_strided_slice %35 {offsets = [0, 16], sizes = [16, 8], strides = [1, 1]} : vector<16x32xf32> to vector<16x8xf32>
    %69 = vector.shape_cast %68 : vector<16x8xf32> to vector<2x8x8xf32>
    %70 = vector.extract_strided_slice %35 {offsets = [0, 24], sizes = [16, 8], strides = [1, 1]} : vector<16x32xf32> to vector<16x8xf32>
    %71 = vector.shape_cast %70 : vector<16x8xf32> to vector<2x8x8xf32>
    %72 = vector.shape_cast %65 : vector<2x8x8xf32> to vector<1x2x8x8xf32>
    %73 = vector.shape_cast %67 : vector<2x8x8xf32> to vector<1x2x8x8xf32>
    %74 = vector.shape_cast %69 : vector<2x8x8xf32> to vector<1x2x8x8xf32>
    %75 = vector.shape_cast %71 : vector<2x8x8xf32> to vector<1x2x8x8xf32>
    %76 = tpu.concatenate %72, %73, %74, %75 in 0 : vector<1x2x8x8xf32>, vector<1x2x8x8xf32>, vector<1x2x8x8xf32>, vector<1x2x8x8xf32> -> vector<4x2x8x8xf32>
    %77 = vector.shape_cast %76 : vector<4x2x8x8xf32> to vector<8x8x8xf32>
    "tpu.trace_start"() <{level = 10 : i32, message = "xqd,xkd->xqk"}> : () -> ()
    %cst_19 = arith.constant dense<0.000000e+00> : vector<8x8x8xf32>
    %78 = tpu.matmul %49, %63, %cst_19 {dimension_numbers = #tpu.dot_dimension_numbers<[2], [2], [1], [1], [0, 0, 0, 1, 1, 1], [0], [0]>} : vector<8x8x8xf32>, vector<8x8x8xf32>, vector<8x8x8xf32> -> vector<8x8x8xf32>
    "tpu.trace_stop"() : () -> ()
    %cst_20 = arith.constant 0.353553385 : f32
    %79 = vector.broadcast %cst_20 : f32 to vector<8x8x8xf32>
    %80 = arith.mulf %78, %79 : vector<8x8x8xf32>
    %cst_21 = arith.constant dense<0xFF800000> : vector<8x8xf32>
    %81 = vector.multi_reduction <maximumf>, %80, %cst_21 [2] : vector<8x8x8xf32> to vector<8x8xf32>
    %82 = vector.shape_cast %81 : vector<8x8xf32> to vector<8x8x1xf32>
    %83 = vector.broadcast %82 : vector<8x8x1xf32> to vector<8x8x8xf32>
    %84 = arith.subf %80, %83 : vector<8x8x8xf32>
    %85 = math.exp %84 : vector<8x8x8xf32>
    %cst_22 = arith.constant dense<0.000000e+00> : vector<8x8xf32>
    %86 = vector.multi_reduction <add>, %85, %cst_22 [2] : vector<8x8x8xf32> to vector<8x8xf32>
    %87 = vector.shape_cast %86 : vector<8x8xf32> to vector<8x8x1xf32>
    %88 = tpu.reciprocal %87 {approx = true} : vector<8x8x1xf32> -> vector<8x8x1xf32>
    %89 = vector.broadcast %88 : vector<8x8x1xf32> to vector<8x8x8xf32>
    %90 = arith.mulf %85, %89 : vector<8x8x8xf32>
    %91 = vector.shape_cast %90 : vector<8x8x8xf32> to vector<4x2x8x8xf32>
    %cst_23 = arith.constant dense<0.000000e+00> : vector<2x8x8xf32>
    %92 = vector.multi_reduction <add>, %91, %cst_23 [0] : vector<4x2x8x8xf32> to vector<2x8x8xf32>
    %cst_24 = arith.constant 2.500000e-01 : f32
    %93 = vector.broadcast %cst_24 : f32 to vector<2x8x8xf32>
    %94 = arith.mulf %92, %93 : vector<2x8x8xf32>
    %c0_25 = arith.constant 0 : index
    %c0_26 = arith.constant 0 : index
    %c0_27 = arith.constant 0 : index
    %c0_28 = arith.constant 0 : index
    %95 = vector.load %arg6[%c0_25, %c0_26, %c0_27, %c0_28] : memref<2x2x8x8xf32, #tpu.memory_space<vmem>>, vector<1x2x8x8xf32>
    %96 = vector.shape_cast %95 : vector<1x2x8x8xf32> to vector<2x8x8xf32>
    %97 = vector.shape_cast %94 : vector<2x8x8xf32> to vector<1x2x8x8xf32>
    tpu.vector_store %arg6[%c0_25, %c0_26, %c0_27, %c0_28], %97 {strides = array<i32>} : memref<2x2x8x8xf32, #tpu.memory_space<vmem>>, vector<1x2x8x8xf32>,
    "tpu.trace_start"() <{level = 10 : i32, message = "xqk,xkd->xqd"}> : () -> ()
    %cst_29 = arith.constant dense<0.000000e+00> : vector<8x8x8xf32>
    %98 = tpu.matmul %90, %77, %cst_29 {dimension_numbers = #tpu.dot_dimension_numbers<[2], [1], [1], [2], [0, 0, 0, 1, 1, 2], [0], [0]>} : vector<8x8x8xf32>, vector<8x8x8xf32>, vector<8x8x8xf32> -> vector<8x8x8xf32>
    "tpu.trace_stop"() : () -> ()
    %99 = vector.shape_cast %98 : vector<8x8x8xf32> to vector<4x2x8x8xf32>
    %100 = vector.extract_strided_slice %99 {offsets = [0, 0, 0, 0], sizes = [1, 2, 8, 8], strides = [1, 1, 1, 1]} : vector<4x2x8x8xf32> to vector<1x2x8x8xf32>
    %101 = vector.shape_cast %100 : vector<1x2x8x8xf32> to vector<2x8x8xf32>
    %102 = vector.shape_cast %101 : vector<2x8x8xf32> to vector<16x8xf32>
    %103 = vector.extract_strided_slice %99 {offsets = [1, 0, 0, 0], sizes = [1, 2, 8, 8], strides = [1, 1, 1, 1]} : vector<4x2x8x8xf32> to vector<1x2x8x8xf32>
    %104 = vector.shape_cast %103 : vector<1x2x8x8xf32> to vector<2x8x8xf32>
    %105 = vector.shape_cast %104 : vector<2x8x8xf32> to vector<16x8xf32>
    %106 = vector.extract_strided_slice %99 {offsets = [2, 0, 0, 0], sizes = [1, 2, 8, 8], strides = [1, 1, 1, 1]} : vector<4x2x8x8xf32> to vector<1x2x8x8xf32>
    %107 = vector.shape_cast %106 : vector<1x2x8x8xf32> to vector<2x8x8xf32>
    %108 = vector.shape_cast %107 : vector<2x8x8xf32> to vector<16x8xf32>
    %109 = vector.extract_strided_slice %99 {offsets = [3, 0, 0, 0], sizes = [1, 2, 8, 8], strides = [1, 1, 1, 1]} : vector<4x2x8x8xf32> to vector<1x2x8x8xf32>
    %110 = vector.shape_cast %109 : vector<1x2x8x8xf32> to vector<2x8x8xf32>
    %111 = vector.shape_cast %110 : vector<2x8x8xf32> to vector<16x8xf32>
    %112 = tpu.concatenate %102, %105, %108, %111 in 1 : vector<16x8xf32>, vector<16x8xf32>, vector<16x8xf32>, vector<16x8xf32> -> vector<16x32xf32>
    %c128 = arith.constant 128 : index
    %c0_30 = arith.constant 0 : index
    %113 = vector.load %arg2[%c128, %c0_30] : memref<448x64xf32, #tpu.memory_space<vmem>>, vector<32x32xf32>
    %cst_31 = arith.constant dense<0.000000e+00> : vector<16x32xf32>
    %114 = tpu.matmul %112, %113, %cst_31 {dimension_numbers = #tpu.dot_dimension_numbers<[1], [0], [0], [1], [0, 0, 1, 1], [], []>} : vector<16x32xf32>, vector<32x32xf32>, vector<16x32xf32> -> vector<16x32xf32>
    %c4 = arith.constant 4 : index
    %c0_32 = arith.constant 0 : index
    %115 = vector.load %arg3[%c4, %c0_32] : memref<20x64xf32, #tpu.memory_space<vmem>>, vector<1x32xf32>
    %116 = vector.broadcast %115 : vector<1x32xf32> to vector<16x32xf32>
    %117 = arith.addf %114, %116 : vector<16x32xf32>
    %118 = arith.addf %6, %117 : vector<16x32xf32>
    %c7 = arith.constant 7 : index
    %c0_33 = arith.constant 0 : index
    %119 = vector.load %arg3[%c7, %c0_33] : memref<20x64xf32, #tpu.memory_space<vmem>>, vector<1x32xf32>
    %c8 = arith.constant 8 : index
    %c0_34 = arith.constant 0 : index
    %120 = vector.load %arg3[%c8, %c0_34] : memref<20x64xf32, #tpu.memory_space<vmem>>, vector<1x32xf32>
    %cst_35 = arith.constant dense<0.000000e+00> : vector<16xf32>
    %121 = vector.multi_reduction <add>, %118, %cst_35 [1] : vector<16x32xf32> to vector<16xf32>
    %122 = vector.shape_cast %121 : vector<16xf32> to vector<16x1xf32>
    %cst_36 = arith.constant 3.200000e+01 : f32
    %123 = vector.broadcast %cst_36 : f32 to vector<16x1xf32>
    %124 = arith.divf %122, %123 : vector<16x1xf32>
    %125 = vector.broadcast %124 : vector<16x1xf32> to vector<16x32xf32>
    %126 = arith.subf %118, %125 : vector<16x32xf32>
    %127 = arith.mulf %126, %126 : vector<16x32xf32>
    %cst_37 = arith.constant dense<0.000000e+00> : vector<16xf32>
    %128 = vector.multi_reduction <add>, %127, %cst_37 [1] : vector<16x32xf32> to vector<16xf32>
    %129 = vector.shape_cast %128 : vector<16xf32> to vector<16x1xf32>
    %cst_38 = arith.constant 3.200000e+01 : f32
    %130 = vector.broadcast %cst_38 : f32 to vector<16x1xf32>
    %131 = arith.divf %129, %130 : vector<16x1xf32>
    %cst_39 = arith.constant 9.99999974E-6 : f32
    %132 = vector.broadcast %cst_39 : f32 to vector<16x1xf32>
    %133 = arith.addf %131, %132 : vector<16x1xf32>
    %134 = math.rsqrt %133 : vector<16x1xf32>
    %135 = vector.broadcast %134 : vector<16x1xf32> to vector<16x32xf32>
    %136 = arith.mulf %126, %135 : vector<16x32xf32>
    %137 = vector.broadcast %119 : vector<1x32xf32> to vector<16x32xf32>
    %138 = arith.mulf %136, %137 : vector<16x32xf32>
    %139 = vector.broadcast %120 : vector<1x32xf32> to vector<16x32xf32>
    %140 = arith.addf %138, %139 : vector<16x32xf32>
    %c160 = arith.constant 160 : index
    %c0_40 = arith.constant 0 : index
    %141 = vector.load %arg2[%c160, %c0_40] : memref<448x64xf32, #tpu.memory_space<vmem>>, vector<32x64xf32>
    %cst_41 = arith.constant dense<0.000000e+00> : vector<16x64xf32>
    %142 = tpu.matmul %140, %141, %cst_41 {dimension_numbers = #tpu.dot_dimension_numbers<[1], [0], [0], [1], [0, 0, 1, 1], [], []>} : vector<16x32xf32>, vector<32x64xf32>, vector<16x64xf32> -> vector<16x64xf32>
    %c5 = arith.constant 5 : index
    %c0_42 = arith.constant 0 : index
    %143 = vector.load %arg3[%c5, %c0_42] : memref<20x64xf32, #tpu.memory_space<vmem>>, vector<1x64xf32>
    %144 = vector.broadcast %143 : vector<1x64xf32> to vector<16x64xf32>
    %145 = arith.addf %142, %144 : vector<16x64xf32>
    %cst_43 = arith.constant 0.000000e+00 : f32
    %146 = vector.broadcast %cst_43 : f32 to vector<16x64xf32>
    %147 = arith.maximumf %145, %146 : vector<16x64xf32>
    %c192 = arith.constant 192 : index
    %c0_44 = arith.constant 0 : index
    %148 = vector.load %arg2[%c192, %c0_44] : memref<448x64xf32, #tpu.memory_space<vmem>>, vector<64x32xf32>
    %cst_45 = arith.constant dense<0.000000e+00> : vector<16x32xf32>
    %149 = tpu.matmul %147, %148, %cst_45 {dimension_numbers = #tpu.dot_dimension_numbers<[1], [0], [0], [1], [0, 0, 1, 1], [], []>} : vector<16x64xf32>, vector<64x32xf32>, vector<16x32xf32> -> vector<16x32xf32>
    %c6 = arith.constant 6 : index
    %c0_46 = arith.constant 0 : index
    %150 = vector.load %arg3[%c6, %c0_46] : memref<20x64xf32, #tpu.memory_space<vmem>>, vector<1x32xf32>
    %151 = vector.broadcast %150 : vector<1x32xf32> to vector<16x32xf32>
    %152 = arith.addf %149, %151 : vector<16x32xf32>
    %153 = arith.addf %140, %152 : vector<16x32xf32>
    %c9 = arith.constant 9 : index
    %c0_47 = arith.constant 0 : index
    %154 = vector.load %arg3[%c9, %c0_47] : memref<20x64xf32, #tpu.memory_space<vmem>>, vector<1x32xf32>
    %c10 = arith.constant 10 : index
    %c0_48 = arith.constant 0 : index
    %155 = vector.load %arg3[%c10, %c0_48] : memref<20x64xf32, #tpu.memory_space<vmem>>, vector<1x32xf32>
    %cst_49 = arith.constant dense<0.000000e+00> : vector<16xf32>
    %156 = vector.multi_reduction <add>, %153, %cst_49 [1] : vector<16x32xf32> to vector<16xf32>
    %157 = vector.shape_cast %156 : vector<16xf32> to vector<16x1xf32>
    %cst_50 = arith.constant 3.200000e+01 : f32
    %158 = vector.broadcast %cst_50 : f32 to vector<16x1xf32>
    %159 = arith.divf %157, %158 : vector<16x1xf32>
    %160 = vector.broadcast %159 : vector<16x1xf32> to vector<16x32xf32>
    %161 = arith.subf %153, %160 : vector<16x32xf32>
    %162 = arith.mulf %161, %161 : vector<16x32xf32>
    %cst_51 = arith.constant dense<0.000000e+00> : vector<16xf32>
    %163 = vector.multi_reduction <add>, %162, %cst_51 [1] : vector<16x32xf32> to vector<16xf32>
    %164 = vector.shape_cast %163 : vector<16xf32> to vector<16x1xf32>
    %cst_52 = arith.constant 3.200000e+01 : f32
    %165 = vector.broadcast %cst_52 : f32 to vector<16x1xf32>
    %166 = arith.divf %164, %165 : vector<16x1xf32>
    %cst_53 = arith.constant 9.99999974E-6 : f32
    %167 = vector.broadcast %cst_53 : f32 to vector<16x1xf32>
    %168 = arith.addf %166, %167 : vector<16x1xf32>
    %169 = math.rsqrt %168 : vector<16x1xf32>
    %170 = vector.broadcast %169 : vector<16x1xf32> to vector<16x32xf32>
    %171 = arith.mulf %161, %170 : vector<16x32xf32>
    %172 = vector.broadcast %154 : vector<1x32xf32> to vector<16x32xf32>
    %173 = arith.mulf %171, %172 : vector<16x32xf32>
    %174 = vector.broadcast %155 : vector<1x32xf32> to vector<16x32xf32>
    %175 = arith.addf %173, %174 : vector<16x32xf32>
    %176 = vector.extract_strided_slice %175 {offsets = [0, 0], sizes = [8, 32], strides = [1, 1]} : vector<16x32xf32> to vector<8x32xf32>
    %177 = vector.shape_cast %176 : vector<8x32xf32> to vector<8x1x32xf32>
    %c0_54 = arith.constant 0 : index
    %c0_55 = arith.constant 0 : index
    %c0_56 = arith.constant 0 : index
    %178 = vector.load %arg4[%c0_54, %c0_55, %c0_56] : memref<8x2x32xf32, #tpu.memory_space<vmem>>, vector<8x1x32xf32>
    tpu.vector_store %arg4[%c0_54, %c0_55, %c0_56], %177 {strides = array<i32>} : memref<8x2x32xf32, #tpu.memory_space<vmem>>, vector<8x1x32xf32>,
    %179 = vector.extract_strided_slice %175 {offsets = [8, 0], sizes = [8, 32], strides = [1, 1]} : vector<16x32xf32> to vector<8x32xf32>
    %180 = vector.shape_cast %179 : vector<8x32xf32> to vector<8x1x32xf32>
    %c0_57 = arith.constant 0 : index
    %c1_58 = arith.constant 1 : index
    %c0_59 = arith.constant 0 : index
    %181 = vector.load %arg4[%c0_57, %c1_58, %c0_59] : memref<8x2x32xf32, #tpu.memory_space<vmem>>, vector<8x1x32xf32>
    tpu.vector_store %arg4[%c0_57, %c1_58, %c0_59], %180 {strides = array<i32>} : memref<8x2x32xf32, #tpu.memory_space<vmem>>, vector<8x1x32xf32>,
    %cst_60 = arith.constant dense<0.000000e+00> : vector<16x32xf32>
    %182 = tpu.matmul %175, %12, %cst_60 {dimension_numbers = #tpu.dot_dimension_numbers<[1], [0], [0], [1], [0, 0, 1, 1], [], []>} : vector<16x32xf32>, vector<32x32xf32>, vector<16x32xf32> -> vector<16x32xf32>
    %183 = vector.broadcast %13 : vector<1x32xf32> to vector<16x32xf32>
    %184 = arith.addf %182, %183 : vector<16x32xf32>
    %cst_61 = arith.constant 0.000000e+00 : f32
    %185 = vector.broadcast %cst_61 : f32 to vector<16x32xf32>
    %186 = arith.maximumf %184, %185 : vector<16x32xf32>
    %cst_62 = arith.constant dense<0.000000e+00> : vector<16x32xf32>
    %187 = tpu.matmul %186, %14, %cst_62 {dimension_numbers = #tpu.dot_dimension_numbers<[1], [0], [0], [1], [0, 0, 1, 1], [], []>} : vector<16x32xf32>, vector<32x32xf32>, vector<16x32xf32> -> vector<16x32xf32>
    %188 = vector.broadcast %15 : vector<1x32xf32> to vector<16x32xf32>
    %189 = arith.addf %187, %188 : vector<16x32xf32>
    %190 = arith.mulf %11, %189 : vector<16x32xf32>
    %191 = arith.addf %175, %190 : vector<16x32xf32>
    %c256 = arith.constant 256 : index
    %c0_63 = arith.constant 0 : index
    %192 = vector.load %arg2[%c256, %c0_63] : memref<448x64xf32, #tpu.memory_space<vmem>>, vector<32x64xf32>
    %cst_64 = arith.constant dense<0.000000e+00> : vector<16x64xf32>
    %193 = tpu.matmul %191, %192, %cst_64 {dimension_numbers = #tpu.dot_dimension_numbers<[1], [0], [0], [1], [0, 0, 1, 1], [], []>} : vector<16x32xf32>, vector<32x64xf32>, vector<16x64xf32> -> vector<16x64xf32>
    %c11 = arith.constant 11 : index
    %c0_65 = arith.constant 0 : index
    %194 = vector.load %arg3[%c11, %c0_65] : memref<20x64xf32, #tpu.memory_space<vmem>>, vector<1x64xf32>
    %195 = vector.broadcast %194 : vector<1x64xf32> to vector<16x64xf32>
    %196 = arith.addf %193, %195 : vector<16x64xf32>
    %c288 = arith.constant 288 : index
    %c0_66 = arith.constant 0 : index
    %197 = vector.load %arg2[%c288, %c0_66] : memref<448x64xf32, #tpu.memory_space<vmem>>, vector<32x32xf32>
    %cst_67 = arith.constant dense<0.000000e+00> : vector<16x32xf32>
    %198 = tpu.matmul %175, %197, %cst_67 {dimension_numbers = #tpu.dot_dimension_numbers<[1], [0], [0], [1], [0, 0, 1, 1], [], []>} : vector<16x32xf32>, vector<32x32xf32>, vector<16x32xf32> -> vector<16x32xf32>
    %c12 = arith.constant 12 : index
    %c0_68 = arith.constant 0 : index
    %199 = vector.load %arg3[%c12, %c0_68] : memref<20x64xf32, #tpu.memory_space<vmem>>, vector<1x32xf32>
    %200 = vector.broadcast %199 : vector<1x32xf32> to vector<16x32xf32>
    %201 = arith.addf %198, %200 : vector<16x32xf32>
    %202 = vector.extract_strided_slice %196 {offsets = [0, 0], sizes = [16, 8], strides = [1, 1]} : vector<16x64xf32> to vector<16x8xf32>
    %203 = vector.shape_cast %202 : vector<16x8xf32> to vector<2x8x8xf32>
    %204 = vector.extract_strided_slice %196 {offsets = [0, 8], sizes = [16, 8], strides = [1, 1]} : vector<16x64xf32> to vector<16x8xf32>
    %205 = vector.shape_cast %204 : vector<16x8xf32> to vector<2x8x8xf32>
    %206 = vector.extract_strided_slice %196 {offsets = [0, 16], sizes = [16, 8], strides = [1, 1]} : vector<16x64xf32> to vector<16x8xf32>
    %207 = vector.shape_cast %206 : vector<16x8xf32> to vector<2x8x8xf32>
    %208 = vector.extract_strided_slice %196 {offsets = [0, 24], sizes = [16, 8], strides = [1, 1]} : vector<16x64xf32> to vector<16x8xf32>
    %209 = vector.shape_cast %208 : vector<16x8xf32> to vector<2x8x8xf32>
    %210 = vector.shape_cast %203 : vector<2x8x8xf32> to vector<1x2x8x8xf32>
    %211 = vector.shape_cast %205 : vector<2x8x8xf32> to vector<1x2x8x8xf32>
    %212 = vector.shape_cast %207 : vector<2x8x8xf32> to vector<1x2x8x8xf32>
    %213 = vector.shape_cast %209 : vector<2x8x8xf32> to vector<1x2x8x8xf32>
    %214 = tpu.concatenate %210, %211, %212, %213 in 0 : vector<1x2x8x8xf32>, vector<1x2x8x8xf32>, vector<1x2x8x8xf32>, vector<1x2x8x8xf32> -> vector<4x2x8x8xf32>
    %215 = vector.shape_cast %214 : vector<4x2x8x8xf32> to vector<8x8x8xf32>
    %216 = vector.extract_strided_slice %196 {offsets = [0, 32], sizes = [16, 8], strides = [1, 1]} : vector<16x64xf32> to vector<16x8xf32>
    %217 = vector.shape_cast %216 : vector<16x8xf32> to vector<2x8x8xf32>
    %218 = vector.extract_strided_slice %196 {offsets = [0, 40], sizes = [16, 8], strides = [1, 1]} : vector<16x64xf32> to vector<16x8xf32>
    %219 = vector.shape_cast %218 : vector<16x8xf32> to vector<2x8x8xf32>
    %220 = vector.extract_strided_slice %196 {offsets = [0, 48], sizes = [16, 8], strides = [1, 1]} : vector<16x64xf32> to vector<16x8xf32>
    %221 = vector.shape_cast %220 : vector<16x8xf32> to vector<2x8x8xf32>
    %222 = vector.extract_strided_slice %196 {offsets = [0, 56], sizes = [16, 8], strides = [1, 1]} : vector<16x64xf32> to vector<16x8xf32>
    %223 = vector.shape_cast %222 : vector<16x8xf32> to vector<2x8x8xf32>
    %224 = vector.shape_cast %217 : vector<2x8x8xf32> to vector<1x2x8x8xf32>
    %225 = vector.shape_cast %219 : vector<2x8x8xf32> to vector<1x2x8x8xf32>
    %226 = vector.shape_cast %221 : vector<2x8x8xf32> to vector<1x2x8x8xf32>
    %227 = vector.shape_cast %223 : vector<2x8x8xf32> to vector<1x2x8x8xf32>
    %228 = tpu.concatenate %224, %225, %226, %227 in 0 : vector<1x2x8x8xf32>, vector<1x2x8x8xf32>, vector<1x2x8x8xf32>, vector<1x2x8x8xf32> -> vector<4x2x8x8xf32>
    %229 = vector.shape_cast %228 : vector<4x2x8x8xf32> to vector<8x8x8xf32>
    %230 = vector.extract_strided_slice %201 {offsets = [0, 0], sizes = [16, 8], strides = [1, 1]} : vector<16x32xf32> to vector<16x8xf32>
    %231 = vector.shape_cast %230 : vector<16x8xf32> to vector<2x8x8xf32>
    %232 = vector.extract_strided_slice %201 {offsets = [0, 8], sizes = [16, 8], strides = [1, 1]} : vector<16x32xf32> to vector<16x8xf32>
    %233 = vector.shape_cast %232 : vector<16x8xf32> to vector<2x8x8xf32>
    %234 = vector.extract_strided_slice %201 {offsets = [0, 16], sizes = [16, 8], strides = [1, 1]} : vector<16x32xf32> to vector<16x8xf32>
    %235 = vector.shape_cast %234 : vector<16x8xf32> to vector<2x8x8xf32>
    %236 = vector.extract_strided_slice %201 {offsets = [0, 24], sizes = [16, 8], strides = [1, 1]} : vector<16x32xf32> to vector<16x8xf32>
    %237 = vector.shape_cast %236 : vector<16x8xf32> to vector<2x8x8xf32>
    %238 = vector.shape_cast %231 : vector<2x8x8xf32> to vector<1x2x8x8xf32>
    %239 = vector.shape_cast %233 : vector<2x8x8xf32> to vector<1x2x8x8xf32>
    %240 = vector.shape_cast %235 : vector<2x8x8xf32> to vector<1x2x8x8xf32>
    %241 = vector.shape_cast %237 : vector<2x8x8xf32> to vector<1x2x8x8xf32>
    %242 = tpu.concatenate %238, %239, %240, %241 in 0 : vector<1x2x8x8xf32>, vector<1x2x8x8xf32>, vector<1x2x8x8xf32>, vector<1x2x8x8xf32> -> vector<4x2x8x8xf32>
    %243 = vector.shape_cast %242 : vector<4x2x8x8xf32> to vector<8x8x8xf32>
    "tpu.trace_start"() <{level = 10 : i32, message = "xqd,xkd->xqk"}> : () -> ()
    %cst_69 = arith.constant dense<0.000000e+00> : vector<8x8x8xf32>
    %244 = tpu.matmul %215, %229, %cst_69 {dimension_numbers = #tpu.dot_dimension_numbers<[2], [2], [1], [1], [0, 0, 0, 1, 1, 1], [0], [0]>} : vector<8x8x8xf32>, vector<8x8x8xf32>, vector<8x8x8xf32> -> vector<8x8x8xf32>
    "tpu.trace_stop"() : () -> ()
    %cst_70 = arith.constant 0.353553385 : f32
    %245 = vector.broadcast %cst_70 : f32 to vector<8x8x8xf32>
    %246 = arith.mulf %244, %245 : vector<8x8x8xf32>
    %cst_71 = arith.constant dense<0xFF800000> : vector<8x8xf32>
    %247 = vector.multi_reduction <maximumf>, %246, %cst_71 [2] : vector<8x8x8xf32> to vector<8x8xf32>
    %248 = vector.shape_cast %247 : vector<8x8xf32> to vector<8x8x1xf32>
    %249 = vector.broadcast %248 : vector<8x8x1xf32> to vector<8x8x8xf32>
    %250 = arith.subf %246, %249 : vector<8x8x8xf32>
    %251 = math.exp %250 : vector<8x8x8xf32>
    %cst_72 = arith.constant dense<0.000000e+00> : vector<8x8xf32>
    %252 = vector.multi_reduction <add>, %251, %cst_72 [2] : vector<8x8x8xf32> to vector<8x8xf32>
    %253 = vector.shape_cast %252 : vector<8x8xf32> to vector<8x8x1xf32>
    %254 = tpu.reciprocal %253 {approx = true} : vector<8x8x1xf32> -> vector<8x8x1xf32>
    %255 = vector.broadcast %254 : vector<8x8x1xf32> to vector<8x8x8xf32>
    %256 = arith.mulf %251, %255 : vector<8x8x8xf32>
    %257 = vector.shape_cast %256 : vector<8x8x8xf32> to vector<4x2x8x8xf32>
    %cst_73 = arith.constant dense<0.000000e+00> : vector<2x8x8xf32>
    %258 = vector.multi_reduction <add>, %257, %cst_73 [0] : vector<4x2x8x8xf32> to vector<2x8x8xf32>
    %cst_74 = arith.constant 2.500000e-01 : f32
    %259 = vector.broadcast %cst_74 : f32 to vector<2x8x8xf32>
    %260 = arith.mulf %258, %259 : vector<2x8x8xf32>
    %c1_75 = arith.constant 1 : index
    %c0_76 = arith.constant 0 : index
    %c0_77 = arith.constant 0 : index
    %c0_78 = arith.constant 0 : index
    %261 = vector.load %arg6[%c1_75, %c0_76, %c0_77, %c0_78] : memref<2x2x8x8xf32, #tpu.memory_space<vmem>>, vector<1x2x8x8xf32>
    %262 = vector.shape_cast %261 : vector<1x2x8x8xf32> to vector<2x8x8xf32>
    %263 = vector.shape_cast %260 : vector<2x8x8xf32> to vector<1x2x8x8xf32>
    tpu.vector_store %arg6[%c1_75, %c0_76, %c0_77, %c0_78], %263 {strides = array<i32>} : memref<2x2x8x8xf32, #tpu.memory_space<vmem>>, vector<1x2x8x8xf32>,
    "tpu.trace_start"() <{level = 10 : i32, message = "xqk,xkd->xqd"}> : () -> ()
    %cst_79 = arith.constant dense<0.000000e+00> : vector<8x8x8xf32>
    %264 = tpu.matmul %256, %243, %cst_79 {dimension_numbers = #tpu.dot_dimension_numbers<[2], [1], [1], [2], [0, 0, 0, 1, 1, 2], [0], [0]>} : vector<8x8x8xf32>, vector<8x8x8xf32>, vector<8x8x8xf32> -> vector<8x8x8xf32>
    "tpu.trace_stop"() : () -> ()
    %265 = vector.shape_cast %264 : vector<8x8x8xf32> to vector<4x2x8x8xf32>
    %266 = vector.extract_strided_slice %265 {offsets = [0, 0, 0, 0], sizes = [1, 2, 8, 8], strides = [1, 1, 1, 1]} : vector<4x2x8x8xf32> to vector<1x2x8x8xf32>
    %267 = vector.shape_cast %266 : vector<1x2x8x8xf32> to vector<2x8x8xf32>
    %268 = vector.shape_cast %267 : vector<2x8x8xf32> to vector<16x8xf32>
    %269 = vector.extract_strided_slice %265 {offsets = [1, 0, 0, 0], sizes = [1, 2, 8, 8], strides = [1, 1, 1, 1]} : vector<4x2x8x8xf32> to vector<1x2x8x8xf32>
    %270 = vector.shape_cast %269 : vector<1x2x8x8xf32> to vector<2x8x8xf32>
    %271 = vector.shape_cast %270 : vector<2x8x8xf32> to vector<16x8xf32>
    %272 = vector.extract_strided_slice %265 {offsets = [2, 0, 0, 0], sizes = [1, 2, 8, 8], strides = [1, 1, 1, 1]} : vector<4x2x8x8xf32> to vector<1x2x8x8xf32>
    %273 = vector.shape_cast %272 : vector<1x2x8x8xf32> to vector<2x8x8xf32>
    %274 = vector.shape_cast %273 : vector<2x8x8xf32> to vector<16x8xf32>
    %275 = vector.extract_strided_slice %265 {offsets = [3, 0, 0, 0], sizes = [1, 2, 8, 8], strides = [1, 1, 1, 1]} : vector<4x2x8x8xf32> to vector<1x2x8x8xf32>
    %276 = vector.shape_cast %275 : vector<1x2x8x8xf32> to vector<2x8x8xf32>
    %277 = vector.shape_cast %276 : vector<2x8x8xf32> to vector<16x8xf32>
    %278 = tpu.concatenate %268, %271, %274, %277 in 1 : vector<16x8xf32>, vector<16x8xf32>, vector<16x8xf32>, vector<16x8xf32> -> vector<16x32xf32>
    %c320 = arith.constant 320 : index
    %c0_80 = arith.constant 0 : index
    %279 = vector.load %arg2[%c320, %c0_80] : memref<448x64xf32, #tpu.memory_space<vmem>>, vector<32x32xf32>
    %cst_81 = arith.constant dense<0.000000e+00> : vector<16x32xf32>
    %280 = tpu.matmul %278, %279, %cst_81 {dimension_numbers = #tpu.dot_dimension_numbers<[1], [0], [0], [1], [0, 0, 1, 1], [], []>} : vector<16x32xf32>, vector<32x32xf32>, vector<16x32xf32> -> vector<16x32xf32>
    %c13 = arith.constant 13 : index
    %c0_82 = arith.constant 0 : index
    %281 = vector.load %arg3[%c13, %c0_82] : memref<20x64xf32, #tpu.memory_space<vmem>>, vector<1x32xf32>
    %282 = vector.broadcast %281 : vector<1x32xf32> to vector<16x32xf32>
    %283 = arith.addf %280, %282 : vector<16x32xf32>
    %284 = arith.addf %175, %283 : vector<16x32xf32>
    %c16 = arith.constant 16 : index
    %c0_83 = arith.constant 0 : index
    %285 = vector.load %arg3[%c16, %c0_83] : memref<20x64xf32, #tpu.memory_space<vmem>>, vector<1x32xf32>
    %c17 = arith.constant 17 : index
    %c0_84 = arith.constant 0 : index
    %286 = vector.load %arg3[%c17, %c0_84] : memref<20x64xf32, #tpu.memory_space<vmem>>, vector<1x32xf32>
    %cst_85 = arith.constant dense<0.000000e+00> : vector<16xf32>
    %287 = vector.multi_reduction <add>, %284, %cst_85 [1] : vector<16x32xf32> to vector<16xf32>
    %288 = vector.shape_cast %287 : vector<16xf32> to vector<16x1xf32>
    %cst_86 = arith.constant 3.200000e+01 : f32
    %289 = vector.broadcast %cst_86 : f32 to vector<16x1xf32>
    %290 = arith.divf %288, %289 : vector<16x1xf32>
    %291 = vector.broadcast %290 : vector<16x1xf32> to vector<16x32xf32>
    %292 = arith.subf %284, %291 : vector<16x32xf32>
    %293 = arith.mulf %292, %292 : vector<16x32xf32>
    %cst_87 = arith.constant dense<0.000000e+00> : vector<16xf32>
    %294 = vector.multi_reduction <add>, %293, %cst_87 [1] : vector<16x32xf32> to vector<16xf32>
    %295 = vector.shape_cast %294 : vector<16xf32> to vector<16x1xf32>
    %cst_88 = arith.constant 3.200000e+01 : f32
    %296 = vector.broadcast %cst_88 : f32 to vector<16x1xf32>
    %297 = arith.divf %295, %296 : vector<16x1xf32>
    %cst_89 = arith.constant 9.99999974E-6 : f32
    %298 = vector.broadcast %cst_89 : f32 to vector<16x1xf32>
    %299 = arith.addf %297, %298 : vector<16x1xf32>
    %300 = math.rsqrt %299 : vector<16x1xf32>
    %301 = vector.broadcast %300 : vector<16x1xf32> to vector<16x32xf32>
    %302 = arith.mulf %292, %301 : vector<16x32xf32>
    %303 = vector.broadcast %285 : vector<1x32xf32> to vector<16x32xf32>
    %304 = arith.mulf %302, %303 : vector<16x32xf32>
    %305 = vector.broadcast %286 : vector<1x32xf32> to vector<16x32xf32>
    %306 = arith.addf %304, %305 : vector<16x32xf32>
    %c352 = arith.constant 352 : index
    %c0_90 = arith.constant 0 : index
    %307 = vector.load %arg2[%c352, %c0_90] : memref<448x64xf32, #tpu.memory_space<vmem>>, vector<32x64xf32>
    %cst_91 = arith.constant dense<0.000000e+00> : vector<16x64xf32>
    %308 = tpu.matmul %306, %307, %cst_91 {dimension_numbers = #tpu.dot_dimension_numbers<[1], [0], [0], [1], [0, 0, 1, 1], [], []>} : vector<16x32xf32>, vector<32x64xf32>, vector<16x64xf32> -> vector<16x64xf32>
    %c14 = arith.constant 14 : index
    %c0_92 = arith.constant 0 : index
    %309 = vector.load %arg3[%c14, %c0_92] : memref<20x64xf32, #tpu.memory_space<vmem>>, vector<1x64xf32>
    %310 = vector.broadcast %309 : vector<1x64xf32> to vector<16x64xf32>
    %311 = arith.addf %308, %310 : vector<16x64xf32>
    %cst_93 = arith.constant 0.000000e+00 : f32
    %312 = vector.broadcast %cst_93 : f32 to vector<16x64xf32>
    %313 = arith.maximumf %311, %312 : vector<16x64xf32>
    %c384 = arith.constant 384 : index
    %c0_94 = arith.constant 0 : index
    %314 = vector.load %arg2[%c384, %c0_94] : memref<448x64xf32, #tpu.memory_space<vmem>>, vector<64x32xf32>
    %cst_95 = arith.constant dense<0.000000e+00> : vector<16x32xf32>
    %315 = tpu.matmul %313, %314, %cst_95 {dimension_numbers = #tpu.dot_dimension_numbers<[1], [0], [0], [1], [0, 0, 1, 1], [], []>} : vector<16x64xf32>, vector<64x32xf32>, vector<16x32xf32> -> vector<16x32xf32>
    %c15 = arith.constant 15 : index
    %c0_96 = arith.constant 0 : index
    %316 = vector.load %arg3[%c15, %c0_96] : memref<20x64xf32, #tpu.memory_space<vmem>>, vector<1x32xf32>
    %317 = vector.broadcast %316 : vector<1x32xf32> to vector<16x32xf32>
    %318 = arith.addf %315, %317 : vector<16x32xf32>
    %319 = arith.addf %306, %318 : vector<16x32xf32>
    %c18 = arith.constant 18 : index
    %c0_97 = arith.constant 0 : index
    %320 = vector.load %arg3[%c18, %c0_97] : memref<20x64xf32, #tpu.memory_space<vmem>>, vector<1x32xf32>
    %c19 = arith.constant 19 : index
    %c0_98 = arith.constant 0 : index
    %321 = vector.load %arg3[%c19, %c0_98] : memref<20x64xf32, #tpu.memory_space<vmem>>, vector<1x32xf32>
    %cst_99 = arith.constant dense<0.000000e+00> : vector<16xf32>
    %322 = vector.multi_reduction <add>, %319, %cst_99 [1] : vector<16x32xf32> to vector<16xf32>
    %323 = vector.shape_cast %322 : vector<16xf32> to vector<16x1xf32>
    %cst_100 = arith.constant 3.200000e+01 : f32
    %324 = vector.broadcast %cst_100 : f32 to vector<16x1xf32>
    %325 = arith.divf %323, %324 : vector<16x1xf32>
    %326 = vector.broadcast %325 : vector<16x1xf32> to vector<16x32xf32>
    %327 = arith.subf %319, %326 : vector<16x32xf32>
    %328 = arith.mulf %327, %327 : vector<16x32xf32>
    %cst_101 = arith.constant dense<0.000000e+00> : vector<16xf32>
    %329 = vector.multi_reduction <add>, %328, %cst_101 [1] : vector<16x32xf32> to vector<16xf32>
    %330 = vector.shape_cast %329 : vector<16xf32> to vector<16x1xf32>
    %cst_102 = arith.constant 3.200000e+01 : f32
    %331 = vector.broadcast %cst_102 : f32 to vector<16x1xf32>
    %332 = arith.divf %330, %331 : vector<16x1xf32>
    %cst_103 = arith.constant 9.99999974E-6 : f32
    %333 = vector.broadcast %cst_103 : f32 to vector<16x1xf32>
    %334 = arith.addf %332, %333 : vector<16x1xf32>
    %335 = math.rsqrt %334 : vector<16x1xf32>
    %336 = vector.broadcast %335 : vector<16x1xf32> to vector<16x32xf32>
    %337 = arith.mulf %327, %336 : vector<16x32xf32>
    %338 = vector.broadcast %320 : vector<1x32xf32> to vector<16x32xf32>
    %339 = arith.mulf %337, %338 : vector<16x32xf32>
    %340 = vector.broadcast %321 : vector<1x32xf32> to vector<16x32xf32>
    %341 = arith.addf %339, %340 : vector<16x32xf32>
    %342 = vector.extract_strided_slice %341 {offsets = [0, 0], sizes = [8, 32], strides = [1, 1]} : vector<16x32xf32> to vector<8x32xf32>
    %343 = vector.shape_cast %342 : vector<8x32xf32> to vector<8x1x32xf32>
    %c0_104 = arith.constant 0 : index
    %c0_105 = arith.constant 0 : index
    %c0_106 = arith.constant 0 : index
    %344 = vector.load %arg5[%c0_104, %c0_105, %c0_106] : memref<8x2x32xf32, #tpu.memory_space<vmem>>, vector<8x1x32xf32>
    tpu.vector_store %arg5[%c0_104, %c0_105, %c0_106], %343 {strides = array<i32>} : memref<8x2x32xf32, #tpu.memory_space<vmem>>, vector<8x1x32xf32>,
    %345 = vector.extract_strided_slice %341 {offsets = [8, 0], sizes = [8, 32], strides = [1, 1]} : vector<16x32xf32> to vector<8x32xf32>
    %346 = vector.shape_cast %345 : vector<8x32xf32> to vector<8x1x32xf32>
    %c0_107 = arith.constant 0 : index
    %c1_108 = arith.constant 1 : index
    %c0_109 = arith.constant 0 : index
    %347 = vector.load %arg5[%c0_107, %c1_108, %c0_109] : memref<8x2x32xf32, #tpu.memory_space<vmem>>, vector<8x1x32xf32>
    tpu.vector_store %arg5[%c0_107, %c1_108, %c0_109], %346 {strides = array<i32>} : memref<8x2x32xf32, #tpu.memory_space<vmem>>, vector<8x1x32xf32>,
    return
  }
}

</mosaic_0001>

<llo_original>
// kernel: transformer_encoder_forward.1
$region0: #{transformer_encoder_forward.1}
  #allocation0 [shape = 'u32[]', space=smem, size = 0x4, offset = 0x4, fixed_abs, tag = 'smem constant byte address 0x4 - core index']
  #allocation1 [shape = 'u32[72,128]{1,0:T(1,128)}', space=vmem, size = 0x9000, scoped, tag = 'internal scratch']
  %s0 = inlined_call_operand.vmem [shape: f32[8,2,32], index: 0, kind: input, shape index: {}]
  %s1 = inlined_call_operand.vmem [shape: f32[8,2,32], index: 1, kind: input, shape index: {}]
  %s2 = inlined_call_operand.vmem [shape: f32[448,64], index: 2, kind: input, shape index: {}]
  %s3 = inlined_call_operand.vmem [shape: f32[20,64], index: 3, kind: input, shape index: {}]
  %s4 = inlined_call_operand.hbm [shape: f32[8,2,32], index: 4, kind: output, shape index: {0}]
  %s5 = inlined_call_operand.hbm [shape: f32[8,2,32], index: 5, kind: output, shape index: {1}]
  %s6 = inlined_call_operand.hbm [shape: f32[2,2,8,8], index: 6, kind: output, shape index: {2}]
  %7 = xla_tuple %s4, %s5, %s6
  %s8 = sld [smem:[#allocation0]]
  $region42: #{transformer_encoder_forward.1} parent=0
    _
  %s10 = ssub.s32 1, %s8
  %s11 = scalar_select 0, %s10, %s8
  $region1: #{transformer_encoder_forward.1} parent=0
    #allocation2 [shape = 'u8[8192]{0}', space=vmem, size = 0x2000, scoped, tag = 'output window, operand 0, single buffered']
    #allocation3 [shape = 's32[1]{0}', space=sflag, size = 0x4, scoped, tag = 'scoped memory for transformer_encoder_forward.1']
    #allocation4 [shape = 'u8[8192]{0}', space=vmem, size = 0x2000, scoped, tag = 'output window, operand 1, single buffered']
    #allocation5 [shape = 's32[1]{0}', space=sflag, size = 0x4, scoped, tag = 'scoped memory for transformer_encoder_forward.1']
    #allocation6 [shape = 'u8[16384]{0}', space=vmem, size = 0x4000, scoped, tag = 'output window, operand 2, single buffered']
    %12 = vsyncpa [#allocation3], 0
    %13 = vsyncpa [#allocation5], 0
    // Predicated region
    $region2: #{transformer_encoder_forward.1} parent=1 // pred_check
      _
    $region3: #{transformer_encoder_forward.1} parent=1 // pred_check_branch
      %15 = sbr.rel (0) target = $region5
    $region4: #{transformer_encoder_forward.1} parent=1 // pred_region
      _
    $region5: #{transformer_encoder_forward.1} parent=1 // pred_fallthru
      _
    // Predicated region
    $region6: #{transformer_encoder_forward.1} parent=1 // pred_check
      _
    $region7: #{transformer_encoder_forward.1} parent=1 // pred_check_branch
      %17 = sbr.rel (0) target = $region9
    $region8: #{transformer_encoder_forward.1} parent=1 // pred_region
      _
    $region9: #{transformer_encoder_forward.1} parent=1 // pred_fallthru
      _
    // Predicated region
    $region10: #{transformer_encoder_forward.1} parent=1 // pred_check
      _
    $region11: #{transformer_encoder_forward.1} parent=1 // pred_check_branch
      %19 = sbr.rel (0) target = $region13
    $region12: #{transformer_encoder_forward.1} parent=1 // pred_region
      _
    $region13: #{transformer_encoder_forward.1} parent=1 // pred_fallthru
      _
    // Predicated region
    $region14: #{transformer_encoder_forward.1} parent=1 // pred_check
      _
    $region15: #{transformer_encoder_forward.1} parent=1 // pred_check_branch
      %21 = sbr.rel (0) target = $region17
    $region16: #{transformer_encoder_forward.1} parent=1 // pred_region
      _
    $region17: #{transformer_encoder_forward.1} parent=1 // pred_fallthru
      _
    %v22 = vld [vmem:[%s0] sm:$0x3]
    %v23 = vld [vmem:[%s0 + $0x2] sm:$0x3]
    %v24 = vld [vmem:[%s0 + $0x4] sm:$0x3]
    %v25 = vld [vmem:[%s0 + $0x6] sm:$0x3]
    %v26 = vld [vmem:[%s0 + $0x8] sm:$0x3]
    %v27 = vld [vmem:[%s0 + $0xa] sm:$0x3]
    %v28 = vld [vmem:[%s0 + $0xc] sm:$0x3]
    %v29 = vld [vmem:[%s0 + $0xe] sm:$0x3]
    %v30 = vld [vmem:[%s1] sm:$0x3]
    %v31 = vld [vmem:[%s1 + $0x2] sm:$0x3]
    %v32 = vld [vmem:[%s1 + $0x4] sm:$0x3]
    %v33 = vld [vmem:[%s1 + $0x6] sm:$0x3]
    %v34 = vld [vmem:[%s1 + $0x8] sm:$0x3]
    %v35 = vld [vmem:[%s1 + $0xa] sm:$0x3]
    %v36 = vld [vmem:[%s1 + $0xc] sm:$0x3]
    %v37 = vld [vmem:[%s1 + $0xe] sm:$0x3]
    %v46 = vrot.slane %v23, 7
    %vm47 = vcmask 1041409
    %v48 = vsel %vm47, %v46, %v22
    %v49 = vrot.slane %v24, 6
    %vm50 = vcmask 1042434
    %v51 = vsel %vm50, %v49, %v48
    %v52 = vrot.slane %v25, 5
    %vm53 = vcmask 1043459
    %v54 = vsel %vm53, %v52, %v51
    %v55 = vrot.slane %v26, 4
    %vm56 = vcmask 1044484
    %v57 = vsel %vm56, %v55, %v54
    %v58 = vrot.slane %v27, 3
    %vm59 = vcmask 1045509
    %v60 = vsel %vm59, %v58, %v57
    %v61 = vrot.slane %v28, 2
    %vm62 = vcmask 1046534
    %v63 = vsel %vm62, %v61, %v60
    %v64 = vrot.slane %v29, 1
    %vm65 = vcmask 1047559
    %v66 = vsel %vm65, %v64, %v63
    %v68 = vrot.slane %v22, 1
    %v69 = vsel %vm47, %v23, %v68
    %v70 = vrot.slane %v24, 7
    %v71 = vsel %vm50, %v70, %v69
    %v72 = vrot.slane %v25, 6
    %v73 = vsel %vm53, %v72, %v71
    %v74 = vrot.slane %v26, 5
    %v75 = vsel %vm56, %v74, %v73
    %v76 = vrot.slane %v27, 4
    %v77 = vsel %vm59, %v76, %v75
    %v78 = vrot.slane %v28, 3
    %v79 = vsel %vm62, %v78, %v77
    %v80 = vrot.slane %v29, 2
    %v81 = vsel %vm65, %v80, %v79
    %v91 = vrot.slane %v31, 7
    %v92 = vsel %vm47, %v91, %v30
    %v93 = vrot.slane %v32, 6
    %v94 = vsel %vm50, %v93, %v92
    %v95 = vrot.slane %v33, 5
    %v96 = vsel %vm53, %v95, %v94
    %v97 = vrot.slane %v34, 4
    %v98 = vsel %vm56, %v97, %v96
    %v99 = vrot.slane %v35, 3
    %v100 = vsel %vm59, %v99, %v98
    %v101 = vrot.slane %v36, 2
    %v102 = vsel %vm62, %v101, %v100
    %v103 = vrot.slane %v37, 1
    %v104 = vsel %vm65, %v103, %v102
    %v106 = vrot.slane %v30, 1
    %v107 = vsel %vm47, %v31, %v106
    %v108 = vrot.slane %v32, 7
    %v109 = vsel %vm50, %v108, %v107
    %v110 = vrot.slane %v33, 6
    %v111 = vsel %vm53, %v110, %v109
    %v112 = vrot.slane %v34, 5
    %v113 = vsel %vm56, %v112, %v111
    %v114 = vrot.slane %v35, 4
    %v115 = vsel %vm59, %v114, %v113
    %v116 = vrot.slane %v36, 3
    %v117 = vsel %vm62, %v116, %v115
    %v118 = vrot.slane %v37, 2
    %v119 = vsel %vm65, %v118, %v117
    %v121 = vld [vmem:[%s2] sm:$0xff]
    %v122 = vld [vmem:[%s2 + $0x8] sm:$0xff]
    %v123 = vld [vmem:[%s2 + $0x10] sm:$0xff]
    %v124 = vld [vmem:[%s2 + $0x18] sm:$0xff]
    %v125 = vld [vmem:[%s3] sm:$0x1]
    %v126 = vld [vmem:[%s2 + $0x20] sm:$0xff]
    %v127 = vld [vmem:[%s2 + $0x28] sm:$0xff]
    %v128 = vld [vmem:[%s2 + $0x30] sm:$0xff]
    %v129 = vld [vmem:[%s2 + $0x38] sm:$0xff]
    %v130 = vld [vmem:[%s3 + $0x1] sm:$0x1]
    %v131 = vperm.slane %v125, 0
    %vm132 = vcmask 261120
    %v133 = vsel %vm132, %v66, 0
    %v135 = vsel %vm132, %v81, 0
    %137 = vmatpush.msra.mxu0 0.0
    %138 = vmatpush.msra.mxu0 0.0
    %139 = vmatpush.msra.mxu0 0.0
    %140 = vmatpush.msra.mxu0 0.0
    %141 = vmatpush.msra.mxu0 0.0
    %142 = vmatpush.msra.mxu0 0.0
    %143 = vmatpush.msra.mxu0 0.0
    %144 = vmatpush.msra.mxu0 0.0
    %145 = vmatpush.msra.mxu0 0.0
    %146 = vmatpush.msra.mxu0 0.0
    %147 = vmatpush.msra.mxu0 0.0
    %148 = vmatpush.msra.mxu0 0.0
    %149 = vmatpush.msra.mxu0 %v124
    %150 = vmatpush.msra.mxu0 %v123
    %151 = vmatpush.msra.mxu0 %v122
    %152 = vmatpush.msra.mxu0 %v121
    %153 = vmatmul.f32.gmra.mxu0 %v133
    %v154 = vpop.f32.mrf.mxu0
    %v155 = vadd.f32 %v131, %v154
    %156 = vmatmul.f32.gmra.mxu0 %v135
    %v157 = vpop.f32.mrf.mxu0
    %v158 = vadd.f32 %v131, %v157
    %159 = vdwg.mxu0
    %v160 = vmax.f32 %v155, 0.0
    %v161 = vmax.f32 %v158, 0.0
    %v162 = vperm.slane %v130, 0
    %v164 = vsel %vm132, %v160, 0
    %v167 = vsel %vm132, %v161, 0
    %169 = vmatpush.msra.mxu0 0.0
    %170 = vmatpush.msra.mxu0 0.0
    %171 = vmatpush.msra.mxu0 0.0
    %172 = vmatpush.msra.mxu0 0.0
    %173 = vmatpush.msra.mxu0 0.0
    %174 = vmatpush.msra.mxu0 0.0
    %175 = vmatpush.msra.mxu0 0.0
    %176 = vmatpush.msra.mxu0 0.0
    %177 = vmatpush.msra.mxu0 0.0
    %178 = vmatpush.msra.mxu0 0.0
    %179 = vmatpush.msra.mxu0 0.0
    %180 = vmatpush.msra.mxu0 0.0
    %181 = vmatpush.msra.mxu0 %v129
    %182 = vmatpush.msra.mxu0 %v128
    %183 = vmatpush.msra.mxu0 %v127
    %184 = vmatpush.msra.mxu0 %v126
    %185 = vmatmul.f32.gmra.mxu0 %v164
    %v186 = vpop.f32.mrf.mxu0
    %v187 = vadd.f32 %v162, %v186
    %188 = vmatmul.f32.gmra.mxu0 %v167
    %v189 = vpop.f32.mrf.mxu0
    %v190 = vadd.f32 %v162, %v189
    %191 = vdwg.mxu0
    %v192 = vmul.f32 %v104, %v187
    %v193 = vmul.f32 %v119, %v190
    %v194 = vadd.f32 %v66, %v192
    %v195 = vadd.f32 %v81, %v193
    %v196 = vld [vmem:[%s2 + $0x40] sm:$0xff]
    %v197 = vld [vmem:[%s2 + $0x48] sm:$0xff]
    %v198 = vld [vmem:[%s2 + $0x50] sm:$0xff]
    %v199 = vld [vmem:[%s2 + $0x58] sm:$0xff]
    %v200 = vld [vmem:[%s3 + $0x2] sm:$0x1]
    %v201 = vperm.slane %v200, 0
    %v203 = vsel %vm132, %v194, 0
    %v206 = vsel %vm132, %v195, 0
    %208 = vmatpush.msra.mxu0 0.0
    %209 = vmatpush.msra.mxu0 0.0
    %210 = vmatpush.msra.mxu0 0.0
    %211 = vmatpush.msra.mxu0 0.0
    %212 = vmatpush.msra.mxu0 0.0
    %213 = vmatpush.msra.mxu0 0.0
    %214 = vmatpush.msra.mxu0 0.0
    %215 = vmatpush.msra.mxu0 0.0
    %216 = vmatpush.msra.mxu0 0.0
    %217 = vmatpush.msra.mxu0 0.0
    %218 = vmatpush.msra.mxu0 0.0
    %219 = vmatpush.msra.mxu0 0.0
    %220 = vmatpush.msra.mxu0 %v199
    %221 = vmatpush.msra.mxu0 %v198
    %222 = vmatpush.msra.mxu0 %v197
    %223 = vmatpush.msra.mxu0 %v196
    %224 = vmatmul.f32.gmra.mxu0 %v203
    %v225 = vpop.f32.mrf.mxu0
    %v226 = vadd.f32 %v201, %v225
    %227 = vmatmul.f32.gmra.mxu0 %v206
    %v228 = vpop.f32.mrf.mxu0
    %v229 = vadd.f32 %v201, %v228
    %230 = vdwg.mxu0
    %v231 = vld [vmem:[%s2 + $0x60] sm:$0xff]
    %v232 = vld [vmem:[%s2 + $0x68] sm:$0xff]
    %v233 = vld [vmem:[%s2 + $0x70] sm:$0xff]
    %v234 = vld [vmem:[%s2 + $0x78] sm:$0xff]
    %v235 = vld [vmem:[%s3 + $0x3] sm:$0x1]
    %v236 = vperm.slane %v235, 0
    %237 = vmatpush.msra.mxu0 0.0
    %238 = vmatpush.msra.mxu0 0.0
    %239 = vmatpush.msra.mxu0 0.0
    %240 = vmatpush.msra.mxu0 0.0
    %241 = vmatpush.msra.mxu0 0.0
    %242 = vmatpush.msra.mxu0 0.0
    %243 = vmatpush.msra.mxu0 0.0
    %244 = vmatpush.msra.mxu0 0.0
    %245 = vmatpush.msra.mxu0 0.0
    %246 = vmatpush.msra.mxu0 0.0
    %247 = vmatpush.msra.mxu0 0.0
    %248 = vmatpush.msra.mxu0 0.0
    %249 = vmatpush.msra.mxu0 %v234
    %250 = vmatpush.msra.mxu0 %v233
    %251 = vmatpush.msra.mxu0 %v232
    %252 = vmatpush.msra.mxu0 %v231
    %253 = vmatmul.f32.gmra.mxu0 %v133
    %v254 = vpop.f32.mrf.mxu0
    %v255 = vadd.f32 %v236, %v254
    %256 = vmatmul.f32.gmra.mxu0 %v135
    %v257 = vpop.f32.mrf.mxu0
    %v258 = vadd.f32 %v236, %v257
    %259 = vdwg.mxu0
    %262 = vrot.lane.b32.xlu0 %v226, 120
    %v263 = vpop.permute.xlu0 %262
    %264 = vrot.lane.b32.xlu0 %v229, 120
    %v265 = vpop.permute.xlu0 %264
    %266 = vrot.lane.b32.xlu0 %v226, 112
    %v267 = vpop.permute.xlu0 %266
    %268 = vrot.lane.b32.xlu0 %v229, 112
    %v269 = vpop.permute.xlu0 %268
    %270 = vrot.lane.b32.xlu0 %v226, 104
    %v271 = vpop.permute.xlu0 %270
    %272 = vrot.lane.b32.xlu0 %v229, 104
    %v273 = vpop.permute.xlu0 %272
    %276 = vrot.lane.b32.xlu0 %v255, 120
    %v277 = vpop.permute.xlu0 %276
    %278 = vrot.lane.b32.xlu0 %v258, 120
    %v279 = vpop.permute.xlu0 %278
    %282 = vrot.lane.b32.xlu0 %v255, 112
    %v283 = vpop.permute.xlu0 %282
    %284 = vrot.lane.b32.xlu0 %v258, 112
    %v285 = vpop.permute.xlu0 %284
    %288 = vrot.lane.b32.xlu0 %v255, 104
    %v289 = vpop.permute.xlu0 %288
    %290 = vrot.lane.b32.xlu0 %v258, 104
    %v291 = vpop.permute.xlu0 %290
    %294 = vrot.lane.b32.xlu0 %v226, 96
    %v295 = vpop.permute.xlu0 %294
    %vm296 = vcmask 64512
    %v297 = vsel %vm296, %v226, 0
    %v299 = vsel %vm296, %v295, 0
    %301 = vmatpush.xpose.msra.mxu0 0.0
    %302 = vmatpush.xpose.msra.mxu0 0.0
    %303 = vmatpush.xpose.msra.mxu0 0.0
    %304 = vmatpush.xpose.msra.mxu0 0.0
    %305 = vmatpush.xpose.msra.mxu0 0.0
    %306 = vmatpush.xpose.msra.mxu0 0.0
    %307 = vmatpush.xpose.msra.mxu0 0.0
    %308 = vmatpush.xpose.msra.mxu0 0.0
    %309 = vmatpush.xpose.msra.mxu0 0.0
    %310 = vmatpush.xpose.msra.mxu0 0.0
    %311 = vmatpush.xpose.msra.mxu0 0.0
    %312 = vmatpush.xpose.msra.mxu0 0.0
    %313 = vmatpush.xpose.msra.mxu0 0.0
    %314 = vmatpush.xpose.msra.mxu0 0.0
    %315 = vmatpush.xpose.msra.mxu0 0.0
    %316 = vmatpush.xpose.msra.mxu0 %v299
    %317 = vmatmul.f32.gmra.mxu0 %v297
    %v318 = vpop.f32.mrf.mxu0
    %v319 = vadd.f32 0.0, %v318
    %320 = vdwg.mxu0
    %321 = vrot.lane.b32.xlu0 %v229, 96
    %v322 = vpop.permute.xlu0 %321
    %v323 = vsel %vm296, %v229, 0
    %v325 = vsel %vm296, %v322, 0
    %327 = vmatpush.xpose.msra.mxu0 0.0
    %328 = vmatpush.xpose.msra.mxu0 0.0
    %329 = vmatpush.xpose.msra.mxu0 0.0
    %330 = vmatpush.xpose.msra.mxu0 0.0
    %331 = vmatpush.xpose.msra.mxu0 0.0
    %332 = vmatpush.xpose.msra.mxu0 0.0
    %333 = vmatpush.xpose.msra.mxu0 0.0
    %334 = vmatpush.xpose.msra.mxu0 0.0
    %335 = vmatpush.xpose.msra.mxu0 0.0
    %336 = vmatpush.xpose.msra.mxu0 0.0
    %337 = vmatpush.xpose.msra.mxu0 0.0
    %338 = vmatpush.xpose.msra.mxu0 0.0
    %339 = vmatpush.xpose.msra.mxu0 0.0
    %340 = vmatpush.xpose.msra.mxu0 0.0
    %341 = vmatpush.xpose.msra.mxu0 0.0
    %342 = vmatpush.xpose.msra.mxu0 %v325
    %343 = vmatmul.f32.gmra.mxu0 %v323
    %v344 = vpop.f32.mrf.mxu0
    %v345 = vadd.f32 0.0, %v344
    %346 = vdwg.mxu0
    %347 = vrot.lane.b32.xlu0 %v263, 96
    %v348 = vpop.permute.xlu0 %347
    %v349 = vsel %vm296, %v263, 0
    %v351 = vsel %vm296, %v348, 0
    %353 = vmatpush.xpose.msra.mxu0 0.0
    %354 = vmatpush.xpose.msra.mxu0 0.0
    %355 = vmatpush.xpose.msra.mxu0 0.0
    %356 = vmatpush.xpose.msra.mxu0 0.0
    %357 = vmatpush.xpose.msra.mxu0 0.0
    %358 = vmatpush.xpose.msra.mxu0 0.0
    %359 = vmatpush.xpose.msra.mxu0 0.0
    %360 = vmatpush.xpose.msra.mxu0 0.0
    %361 = vmatpush.xpose.msra.mxu0 0.0
    %362 = vmatpush.xpose.msra.mxu0 0.0
    %363 = vmatpush.xpose.msra.mxu0 0.0
    %364 = vmatpush.xpose.msra.mxu0 0.0
    %365 = vmatpush.xpose.msra.mxu0 0.0
    %366 = vmatpush.xpose.msra.mxu0 0.0
    %367 = vmatpush.xpose.msra.mxu0 0.0
    %368 = vmatpush.xpose.msra.mxu0 %v351
    %369 = vmatmul.f32.gmra.mxu0 %v349
    %v370 = vpop.f32.mrf.mxu0
    %v371 = vadd.f32 0.0, %v370
    %372 = vdwg.mxu0
    %373 = vrot.lane.b32.xlu0 %v265, 96
    %v374 = vpop.permute.xlu0 %373
    %v375 = vsel %vm296, %v265, 0
    %v377 = vsel %vm296, %v374, 0
    %379 = vmatpush.xpose.msra.mxu0 0.0
    %380 = vmatpush.xpose.msra.mxu0 0.0
    %381 = vmatpush.xpose.msra.mxu0 0.0
    %382 = vmatpush.xpose.msra.mxu0 0.0
    %383 = vmatpush.xpose.msra.mxu0 0.0
    %384 = vmatpush.xpose.msra.mxu0 0.0
    %385 = vmatpush.xpose.msra.mxu0 0.0
    %386 = vmatpush.xpose.msra.mxu0 0.0
    %387 = vmatpush.xpose.msra.mxu0 0.0
    %388 = vmatpush.xpose.msra.mxu0 0.0
    %389 = vmatpush.xpose.msra.mxu0 0.0
    %390 = vmatpush.xpose.msra.mxu0 0.0
    %391 = vmatpush.xpose.msra.mxu0 0.0
    %392 = vmatpush.xpose.msra.mxu0 0.0
    %393 = vmatpush.xpose.msra.mxu0 0.0
    %394 = vmatpush.xpose.msra.mxu0 %v377
    %395 = vmatmul.f32.gmra.mxu0 %v375
    %v396 = vpop.f32.mrf.mxu0
    %v397 = vadd.f32 0.0, %v396
    %398 = vdwg.mxu0
    %399 = vrot.lane.b32.xlu0 %v267, 96
    %v400 = vpop.permute.xlu0 %399
    %v401 = vsel %vm296, %v267, 0
    %v403 = vsel %vm296, %v400, 0
    %405 = vmatpush.xpose.msra.mxu0 0.0
    %406 = vmatpush.xpose.msra.mxu0 0.0
    %407 = vmatpush.xpose.msra.mxu0 0.0
    %408 = vmatpush.xpose.msra.mxu0 0.0
    %409 = vmatpush.xpose.msra.mxu0 0.0
    %410 = vmatpush.xpose.msra.mxu0 0.0
    %411 = vmatpush.xpose.msra.mxu0 0.0
    %412 = vmatpush.xpose.msra.mxu0 0.0
    %413 = vmatpush.xpose.msra.mxu0 0.0
    %414 = vmatpush.xpose.msra.mxu0 0.0
    %415 = vmatpush.xpose.msra.mxu0 0.0
    %416 = vmatpush.xpose.msra.mxu0 0.0
    %417 = vmatpush.xpose.msra.mxu0 0.0
    %418 = vmatpush.xpose.msra.mxu0 0.0
    %419 = vmatpush.xpose.msra.mxu0 0.0
    %420 = vmatpush.xpose.msra.mxu0 %v403
    %421 = vmatmul.f32.gmra.mxu0 %v401
    %v422 = vpop.f32.mrf.mxu0
    %v423 = vadd.f32 0.0, %v422
    %424 = vdwg.mxu0
    %425 = vrot.lane.b32.xlu0 %v269, 96
    %v426 = vpop.permute.xlu0 %425
    %v427 = vsel %vm296, %v269, 0
    %v429 = vsel %vm296, %v426, 0
    %431 = vmatpush.xpose.msra.mxu0 0.0
    %432 = vmatpush.xpose.msra.mxu0 0.0
    %433 = vmatpush.xpose.msra.mxu0 0.0
    %434 = vmatpush.xpose.msra.mxu0 0.0
    %435 = vmatpush.xpose.msra.mxu0 0.0
    %436 = vmatpush.xpose.msra.mxu0 0.0
    %437 = vmatpush.xpose.msra.mxu0 0.0
    %438 = vmatpush.xpose.msra.mxu0 0.0
    %439 = vmatpush.xpose.msra.mxu0 0.0
    %440 = vmatpush.xpose.msra.mxu0 0.0
    %441 = vmatpush.xpose.msra.mxu0 0.0
    %442 = vmatpush.xpose.msra.mxu0 0.0
    %443 = vmatpush.xpose.msra.mxu0 0.0
    %444 = vmatpush.xpose.msra.mxu0 0.0
    %445 = vmatpush.xpose.msra.mxu0 0.0
    %446 = vmatpush.xpose.msra.mxu0 %v429
    %447 = vmatmul.f32.gmra.mxu0 %v427
    %v448 = vpop.f32.mrf.mxu0
    %v449 = vadd.f32 0.0, %v448
    %450 = vdwg.mxu0
    %451 = vrot.lane.b32.xlu0 %v271, 96
    %v452 = vpop.permute.xlu0 %451
    %v453 = vsel %vm296, %v271, 0
    %v455 = vsel %vm296, %v452, 0
    %457 = vmatpush.xpose.msra.mxu0 0.0
    %458 = vmatpush.xpose.msra.mxu0 0.0
    %459 = vmatpush.xpose.msra.mxu0 0.0
    %460 = vmatpush.xpose.msra.mxu0 0.0
    %461 = vmatpush.xpose.msra.mxu0 0.0
    %462 = vmatpush.xpose.msra.mxu0 0.0
    %463 = vmatpush.xpose.msra.mxu0 0.0
    %464 = vmatpush.xpose.msra.mxu0 0.0
    %465 = vmatpush.xpose.msra.mxu0 0.0
    %466 = vmatpush.xpose.msra.mxu0 0.0
    %467 = vmatpush.xpose.msra.mxu0 0.0
    %468 = vmatpush.xpose.msra.mxu0 0.0
    %469 = vmatpush.xpose.msra.mxu0 0.0
    %470 = vmatpush.xpose.msra.mxu0 0.0
    %471 = vmatpush.xpose.msra.mxu0 0.0
    %472 = vmatpush.xpose.msra.mxu0 %v455
    %473 = vmatmul.f32.gmra.mxu0 %v453
    %v474 = vpop.f32.mrf.mxu0
    %v475 = vadd.f32 0.0, %v474
    %476 = vdwg.mxu0
    %477 = vrot.lane.b32.xlu0 %v273, 96
    %v478 = vpop.permute.xlu0 %477
    %v479 = vsel %vm296, %v273, 0
    %v481 = vsel %vm296, %v478, 0
    %483 = vmatpush.xpose.msra.mxu0 0.0
    %484 = vmatpush.xpose.msra.mxu0 0.0
    %485 = vmatpush.xpose.msra.mxu0 0.0
    %486 = vmatpush.xpose.msra.mxu0 0.0
    %487 = vmatpush.xpose.msra.mxu0 0.0
    %488 = vmatpush.xpose.msra.mxu0 0.0
    %489 = vmatpush.xpose.msra.mxu0 0.0
    %490 = vmatpush.xpose.msra.mxu0 0.0
    %491 = vmatpush.xpose.msra.mxu0 0.0
    %492 = vmatpush.xpose.msra.mxu0 0.0
    %493 = vmatpush.xpose.msra.mxu0 0.0
    %494 = vmatpush.xpose.msra.mxu0 0.0
    %495 = vmatpush.xpose.msra.mxu0 0.0
    %496 = vmatpush.xpose.msra.mxu0 0.0
    %497 = vmatpush.xpose.msra.mxu0 0.0
    %498 = vmatpush.xpose.msra.mxu0 %v481
    %499 = vmatmul.f32.gmra.mxu0 %v479
    %v500 = vpop.f32.mrf.mxu0
    %v501 = vadd.f32 0.0, %v500
    %502 = vdwg.mxu0
    %v503 = vmul.f32 %v319, 0.35355338
    %v504 = vmul.f32 %v345, 0.35355338
    %v505 = vmul.f32 %v371, 0.35355338
    %v506 = vmul.f32 %v397, 0.35355338
    %v507 = vmul.f32 %v423, 0.35355338
    %v508 = vmul.f32 %v449, 0.35355338
    %v509 = vmul.f32 %v475, 0.35355338
    %v510 = vmul.f32 %v501, 0.35355338
    %v511 = vsel %vm296, %v503, -inf
    %512 = vmax.xlane.f32.xlu0 %v511
    %v513 = vpop.xlane.xlu0 %512
    %v514 = vsel %vm296, %v504, -inf
    %515 = vmax.xlane.f32.xlu0 %v514
    %v516 = vpop.xlane.xlu0 %515
    %v517 = vsel %vm296, %v505, -inf
    %518 = vmax.xlane.f32.xlu0 %v517
    %v519 = vpop.xlane.xlu0 %518
    %v520 = vsel %vm296, %v506, -inf
    %521 = vmax.xlane.f32.xlu0 %v520
    %v522 = vpop.xlane.xlu0 %521
    %v523 = vsel %vm296, %v507, -inf
    %524 = vmax.xlane.f32.xlu0 %v523
    %v525 = vpop.xlane.xlu0 %524
    %v526 = vsel %vm296, %v508, -inf
    %527 = vmax.xlane.f32.xlu0 %v526
    %v528 = vpop.xlane.xlu0 %527
    %v529 = vsel %vm296, %v509, -inf
    %530 = vmax.xlane.f32.xlu0 %v529
    %v531 = vpop.xlane.xlu0 %530
    %v532 = vsel %vm296, %v510, -inf
    %533 = vmax.xlane.f32.xlu0 %v532
    %v534 = vpop.xlane.xlu0 %533
    %v535 = vsub.f32 %v503, %v513
    %v536 = vsub.f32 %v504, %v516
    %v537 = vsub.f32 %v505, %v519
    %v538 = vsub.f32 %v506, %v522
    %v539 = vsub.f32 %v507, %v525
    %v540 = vsub.f32 %v508, %v528
    %v541 = vsub.f32 %v509, %v531
    %v542 = vsub.f32 %v510, %v534
    %v543 = vmul.f32 %v535, 1.442695
    %v544 = vpow.pop %v543
    %v545 = vmul.f32 %v536, 1.442695
    %v546 = vpow.pop %v545
    %v547 = vmul.f32 %v537, 1.442695
    %v548 = vpow.pop %v547
    %v549 = vmul.f32 %v538, 1.442695
    %v550 = vpow.pop %v549
    %v551 = vmul.f32 %v539, 1.442695
    %v552 = vpow.pop %v551
    %v553 = vmul.f32 %v540, 1.442695
    %v554 = vpow.pop %v553
    %v555 = vmul.f32 %v541, 1.442695
    %v556 = vpow.pop %v555
    %v557 = vmul.f32 %v542, 1.442695
    %v558 = vpow.pop %v557
    %v559 = vsel %vm296, %v544, 0.0
    %560 = vadd.xlane.f32.xlu0 %v559
    %v561 = vpop.xlane.xlu0 %560
    %v562 = vsel %vm296, %v546, 0.0
    %563 = vadd.xlane.f32.xlu0 %v562
    %v564 = vpop.xlane.xlu0 %563
    %v565 = vsel %vm296, %v548, 0.0
    %566 = vadd.xlane.f32.xlu0 %v565
    %v567 = vpop.xlane.xlu0 %566
    %v568 = vsel %vm296, %v550, 0.0
    %569 = vadd.xlane.f32.xlu0 %v568
    %v570 = vpop.xlane.xlu0 %569
    %v571 = vsel %vm296, %v552, 0.0
    %572 = vadd.xlane.f32.xlu0 %v571
    %v573 = vpop.xlane.xlu0 %572
    %v574 = vsel %vm296, %v554, 0.0
    %575 = vadd.xlane.f32.xlu0 %v574
    %v576 = vpop.xlane.xlu0 %575
    %v577 = vsel %vm296, %v556, 0.0
    %578 = vadd.xlane.f32.xlu0 %v577
    %v579 = vpop.xlane.xlu0 %578
    %v580 = vsel %vm296, %v558, 0.0
    %581 = vadd.xlane.f32.xlu0 %v580
    %v582 = vpop.xlane.xlu0 %581
    %v583 = vrcp.pop %v561
    %v584 = vrcp.pop %v564
    %v585 = vrcp.pop %v567
    %v586 = vrcp.pop %v570
    %v587 = vrcp.pop %v573
    %v588 = vrcp.pop %v576
    %v589 = vrcp.pop %v579
    %v590 = vrcp.pop %v582
    %v591 = vmul.f32 %v544, %v583
    %v592 = vmul.f32 %v546, %v584
    %v593 = vmul.f32 %v548, %v585
    %v594 = vmul.f32 %v550, %v586
    %v595 = vmul.f32 %v552, %v587
    %v596 = vmul.f32 %v554, %v588
    %v597 = vmul.f32 %v556, %v589
    %v598 = vmul.f32 %v558, %v590
    %v599 = vsel %vm296, %v591, 0.0
    %v600 = vsel %vm296, %v593, 0.0
    %v601 = vadd.f32 %v599, %v600
    %v602 = vsel %vm296, %v595, 0.0
    %v603 = vadd.f32 %v601, %v602
    %v604 = vsel %vm296, %v597, 0.0
    %v605 = vadd.f32 %v603, %v604
    %v606 = vsel %vm296, %v592, 0.0
    %v607 = vsel %vm296, %v594, 0.0
    %v608 = vadd.f32 %v606, %v607
    %v609 = vsel %vm296, %v596, 0.0
    %v610 = vadd.f32 %v608, %v609
    %v611 = vsel %vm296, %v598, 0.0
    %v612 = vadd.f32 %v610, %v611
    %v613 = vmul.f32 %v605, 0.25
    %v614 = vmul.f32 %v612, 0.25
    %615 = vst.msk [vmem:[#allocation6] sm:$0xff] %vm296, %v613
    %616 = vst.msk [vmem:[#allocation6 + $0x8] sm:$0xff] %vm296, %v614
    %v618 = vsel %vm296, %v591, 0
    %620 = vmatpush.msra.mxu0 0.0
    %621 = vmatpush.msra.mxu0 0.0
    %622 = vmatpush.msra.mxu0 0.0
    %623 = vmatpush.msra.mxu0 0.0
    %624 = vmatpush.msra.mxu0 0.0
    %625 = vmatpush.msra.mxu0 0.0
    %626 = vmatpush.msra.mxu0 0.0
    %627 = vmatpush.msra.mxu0 0.0
    %628 = vmatpush.msra.mxu0 0.0
    %629 = vmatpush.msra.mxu0 0.0
    %630 = vmatpush.msra.mxu0 0.0
    %631 = vmatpush.msra.mxu0 0.0
    %632 = vmatpush.msra.mxu0 0.0
    %633 = vmatpush.msra.mxu0 0.0
    %634 = vmatpush.msra.mxu0 0.0
    %635 = vmatpush.msra.mxu0 %v255
    %636 = vmatmul.f32.gmra.mxu0 %v618
    %v637 = vpop.f32.mrf.mxu0
    %v638 = vadd.f32 0.0, %v637
    %639 = vdwg.mxu0
    %v641 = vsel %vm296, %v592, 0
    %643 = vmatpush.msra.mxu0 0.0
    %644 = vmatpush.msra.mxu0 0.0
    %645 = vmatpush.msra.mxu0 0.0
    %646 = vmatpush.msra.mxu0 0.0
    %647 = vmatpush.msra.mxu0 0.0
    %648 = vmatpush.msra.mxu0 0.0
    %649 = vmatpush.msra.mxu0 0.0
    %650 = vmatpush.msra.mxu0 0.0
    %651 = vmatpush.msra.mxu0 0.0
    %652 = vmatpush.msra.mxu0 0.0
    %653 = vmatpush.msra.mxu0 0.0
    %654 = vmatpush.msra.mxu0 0.0
    %655 = vmatpush.msra.mxu0 0.0
    %656 = vmatpush.msra.mxu0 0.0
    %657 = vmatpush.msra.mxu0 0.0
    %658 = vmatpush.msra.mxu0 %v258
    %659 = vmatmul.f32.gmra.mxu0 %v641
    %v660 = vpop.f32.mrf.mxu0
    %v661 = vadd.f32 0.0, %v660
    %662 = vdwg.mxu0
    %v664 = vsel %vm296, %v593, 0
    %666 = vmatpush.msra.mxu0 0.0
    %667 = vmatpush.msra.mxu0 0.0
    %668 = vmatpush.msra.mxu0 0.0
    %669 = vmatpush.msra.mxu0 0.0
    %670 = vmatpush.msra.mxu0 0.0
    %671 = vmatpush.msra.mxu0 0.0
    %672 = vmatpush.msra.mxu0 0.0
    %673 = vmatpush.msra.mxu0 0.0
    %674 = vmatpush.msra.mxu0 0.0
    %675 = vmatpush.msra.mxu0 0.0
    %676 = vmatpush.msra.mxu0 0.0
    %677 = vmatpush.msra.mxu0 0.0
    %678 = vmatpush.msra.mxu0 0.0
    %679 = vmatpush.msra.mxu0 0.0
    %680 = vmatpush.msra.mxu0 0.0
    %681 = vmatpush.msra.mxu0 %v277
    %682 = vmatmul.f32.gmra.mxu0 %v664
    %v683 = vpop.f32.mrf.mxu0
    %v684 = vadd.f32 0.0, %v683
    %685 = vdwg.mxu0
    %v687 = vsel %vm296, %v594, 0
    %689 = vmatpush.msra.mxu0 0.0
    %690 = vmatpush.msra.mxu0 0.0
    %691 = vmatpush.msra.mxu0 0.0
    %692 = vmatpush.msra.mxu0 0.0
    %693 = vmatpush.msra.mxu0 0.0
    %694 = vmatpush.msra.mxu0 0.0
    %695 = vmatpush.msra.mxu0 0.0
    %696 = vmatpush.msra.mxu0 0.0
    %697 = vmatpush.msra.mxu0 0.0
    %698 = vmatpush.msra.mxu0 0.0
    %699 = vmatpush.msra.mxu0 0.0
    %700 = vmatpush.msra.mxu0 0.0
    %701 = vmatpush.msra.mxu0 0.0
    %702 = vmatpush.msra.mxu0 0.0
    %703 = vmatpush.msra.mxu0 0.0
    %704 = vmatpush.msra.mxu0 %v279
    %705 = vmatmul.f32.gmra.mxu0 %v687
    %v706 = vpop.f32.mrf.mxu0
    %v707 = vadd.f32 0.0, %v706
    %708 = vdwg.mxu0
    %v710 = vsel %vm296, %v595, 0
    %712 = vmatpush.msra.mxu0 0.0
    %713 = vmatpush.msra.mxu0 0.0
    %714 = vmatpush.msra.mxu0 0.0
    %715 = vmatpush.msra.mxu0 0.0
    %716 = vmatpush.msra.mxu0 0.0
    %717 = vmatpush.msra.mxu0 0.0
    %718 = vmatpush.msra.mxu0 0.0
    %719 = vmatpush.msra.mxu0 0.0
    %720 = vmatpush.msra.mxu0 0.0
    %721 = vmatpush.msra.mxu0 0.0
    %722 = vmatpush.msra.mxu0 0.0
    %723 = vmatpush.msra.mxu0 0.0
    %724 = vmatpush.msra.mxu0 0.0
    %725 = vmatpush.msra.mxu0 0.0
    %726 = vmatpush.msra.mxu0 0.0
    %727 = vmatpush.msra.mxu0 %v283
    %728 = vmatmul.f32.gmra.mxu0 %v710
    %v729 = vpop.f32.mrf.mxu0
    %v730 = vadd.f32 0.0, %v729
    %731 = vdwg.mxu0
    %v733 = vsel %vm296, %v596, 0
    %735 = vmatpush.msra.mxu0 0.0
    %736 = vmatpush.msra.mxu0 0.0
    %737 = vmatpush.msra.mxu0 0.0
    %738 = vmatpush.msra.mxu0 0.0
    %739 = vmatpush.msra.mxu0 0.0
    %740 = vmatpush.msra.mxu0 0.0
    %741 = vmatpush.msra.mxu0 0.0
    %742 = vmatpush.msra.mxu0 0.0
    %743 = vmatpush.msra.mxu0 0.0
    %744 = vmatpush.msra.mxu0 0.0
    %745 = vmatpush.msra.mxu0 0.0
    %746 = vmatpush.msra.mxu0 0.0
    %747 = vmatpush.msra.mxu0 0.0
    %748 = vmatpush.msra.mxu0 0.0
    %749 = vmatpush.msra.mxu0 0.0
    %750 = vmatpush.msra.mxu0 %v285
    %751 = vmatmul.f32.gmra.mxu0 %v733
    %v752 = vpop.f32.mrf.mxu0
    %v753 = vadd.f32 0.0, %v752
    %754 = vdwg.mxu0
    %v756 = vsel %vm296, %v597, 0
    %758 = vmatpush.msra.mxu0 0.0
    %759 = vmatpush.msra.mxu0 0.0
    %760 = vmatpush.msra.mxu0 0.0
    %761 = vmatpush.msra.mxu0 0.0
    %762 = vmatpush.msra.mxu0 0.0
    %763 = vmatpush.msra.mxu0 0.0
    %764 = vmatpush.msra.mxu0 0.0
    %765 = vmatpush.msra.mxu0 0.0
    %766 = vmatpush.msra.mxu0 0.0
    %767 = vmatpush.msra.mxu0 0.0
    %768 = vmatpush.msra.mxu0 0.0
    %769 = vmatpush.msra.mxu0 0.0
    %770 = vmatpush.msra.mxu0 0.0
    %771 = vmatpush.msra.mxu0 0.0
    %772 = vmatpush.msra.mxu0 0.0
    %773 = vmatpush.msra.mxu0 %v289
    %774 = vmatmul.f32.gmra.mxu0 %v756
    %v775 = vpop.f32.mrf.mxu0
    %v776 = vadd.f32 0.0, %v775
    %777 = vdwg.mxu0
    %v779 = vsel %vm296, %v598, 0
    %781 = vmatpush.msra.mxu0 0.0
    %782 = vmatpush.msra.mxu0 0.0
    %783 = vmatpush.msra.mxu0 0.0
    %784 = vmatpush.msra.mxu0 0.0
    %785 = vmatpush.msra.mxu0 0.0
    %786 = vmatpush.msra.mxu0 0.0
    %787 = vmatpush.msra.mxu0 0.0
    %788 = vmatpush.msra.mxu0 0.0
    %789 = vmatpush.msra.mxu0 0.0
    %790 = vmatpush.msra.mxu0 0.0
    %791 = vmatpush.msra.mxu0 0.0
    %792 = vmatpush.msra.mxu0 0.0
    %793 = vmatpush.msra.mxu0 0.0
    %794 = vmatpush.msra.mxu0 0.0
    %795 = vmatpush.msra.mxu0 0.0
    %796 = vmatpush.msra.mxu0 %v291
    %797 = vmatmul.f32.gmra.mxu0 %v779
    %v798 = vpop.f32.mrf.mxu0
    %v799 = vadd.f32 0.0, %v798
    %800 = vdwg.mxu0
    %803 = vrot.lane.b32.xlu0 %v684, 8
    %v804 = vpop.permute.xlu0 %803
    %805 = vrot.lane.b32.xlu0 %v707, 8
    %v806 = vpop.permute.xlu0 %805
    %811 = vrot.lane.b32.xlu0 %v730, 16
    %v812 = vpop.permute.xlu0 %811
    %813 = vrot.lane.b32.xlu0 %v753, 16
    %v814 = vpop.permute.xlu0 %813
    %819 = vrot.lane.b32.xlu0 %v776, 24
    %v820 = vpop.permute.xlu0 %819
    %821 = vrot.lane.b32.xlu0 %v799, 24
    %v822 = vpop.permute.xlu0 %821
    %v825 = vsel %vm296, %v638, %v804
    %v826 = vsel %vm296, %v661, %v806
    %vm827 = vcmask 130048
    %v828 = vsel %vm827, %v825, %v812
    %v829 = vsel %vm827, %v826, %v814
    %vm830 = vcmask 195584
    %v831 = vsel %vm830, %v828, %v820
    %v832 = vsel %vm830, %v829, %v822
    %v833 = vld [vmem:[%s2 + $0x80] sm:$0xff]
    %v834 = vld [vmem:[%s2 + $0x88] sm:$0xff]
    %v835 = vld [vmem:[%s2 + $0x90] sm:$0xff]
    %v836 = vld [vmem:[%s2 + $0x98] sm:$0xff]
    %v837 = vld [vmem:[%s3 + $0x4] sm:$0x1]
    %v838 = vperm.slane %v837, 0
    %v840 = vsel %vm132, %v831, 0
    %v843 = vsel %vm132, %v832, 0
    %845 = vmatpush.msra.mxu0 0.0
    %846 = vmatpush.msra.mxu0 0.0
    %847 = vmatpush.msra.mxu0 0.0
    %848 = vmatpush.msra.mxu0 0.0
    %849 = vmatpush.msra.mxu0 0.0
    %850 = vmatpush.msra.mxu0 0.0
    %851 = vmatpush.msra.mxu0 0.0
    %852 = vmatpush.msra.mxu0 0.0
    %853 = vmatpush.msra.mxu0 0.0
    %854 = vmatpush.msra.mxu0 0.0
    %855 = vmatpush.msra.mxu0 0.0
    %856 = vmatpush.msra.mxu0 0.0
    %857 = vmatpush.msra.mxu0 %v836
    %858 = vmatpush.msra.mxu0 %v835
    %859 = vmatpush.msra.mxu0 %v834
    %860 = vmatpush.msra.mxu0 %v833
    %861 = vmatmul.f32.gmra.mxu0 %v840
    %v862 = vpop.f32.mrf.mxu0
    %v863 = vadd.f32 %v838, %v862
    %864 = vmatmul.f32.gmra.mxu0 %v843
    %v865 = vpop.f32.mrf.mxu0
    %v866 = vadd.f32 %v838, %v865
    %867 = vdwg.mxu0
    %v868 = vadd.f32 %v66, %v863
    %v869 = vadd.f32 %v81, %v866
    %v870 = vld [vmem:[%s3 + $0x7] sm:$0x1]
    %v871 = vld [vmem:[%s3 + $0x8] sm:$0x1]
    %v872 = vsel %vm132, %v868, 0.0
    %873 = vadd.xlane.f32.xlu0 %v872
    %v874 = vpop.xlane.xlu0 %873
    %v875 = vsel %vm132, %v869, 0.0
    %876 = vadd.xlane.f32.xlu0 %v875
    %v877 = vpop.xlane.xlu0 %876
    %v878 = vrcp.pop 32.0
    %v879 = vmul.f32 32.0, %v878
    %v880 = vsub.f32 1.0, %v879
    %v881 = vmul.f32 %v878, %v880
    %v882 = vadd.f32 %v878, %v881
    %vm883 = vweird.f32 %v878
    %v884 = vsel %vm883, %v878, %v882
    %v885 = vmul.f32 %v874, %v884
    %v886 = vmul.f32 %v877, %v884
    %v887 = vsub.f32 %v868, %v885
    %v888 = vsub.f32 %v869, %v886
    %v889 = vmul.f32 %v887, %v887
    %v890 = vmul.f32 %v888, %v888
    %v891 = vsel %vm132, %v889, 0.0
    %892 = vadd.xlane.f32.xlu0 %v891
    %v893 = vpop.xlane.xlu0 %892
    %v894 = vsel %vm132, %v890, 0.0
    %895 = vadd.xlane.f32.xlu0 %v894
    %v896 = vpop.xlane.xlu0 %895
    %v897 = vmul.f32 %v893, %v884
    %v898 = vmul.f32 %v896, %v884
    %v899 = vadd.f32 %v897, 1e-05
    %v900 = vadd.f32 %v898, 1e-05
    %v901 = vrsqrt.pop %v899
    %v902 = vmul.f32 %v901, %v899
    %v903 = vmul.f32 %v902, %v901
    %v904 = vmul.f32 0.5, %v903
    %v905 = vsub.f32 1.5, %v904
    %v906 = vmul.f32 %v901, %v905
    %vm907 = vweird.f32 %v899
    %vm908 = vweird.f32 %v901
    %vm909 = vmor %vm907, %vm908
    %v910 = vsel %vm909, %v901, %v906
    %v911 = vrsqrt.pop %v900
    %v912 = vmul.f32 %v911, %v900
    %v913 = vmul.f32 %v912, %v911
    %v914 = vmul.f32 0.5, %v913
    %v915 = vsub.f32 1.5, %v914
    %v916 = vmul.f32 %v911, %v915
    %vm917 = vweird.f32 %v900
    %vm918 = vweird.f32 %v911
    %vm919 = vmor %vm917, %vm918
    %v920 = vsel %vm919, %v911, %v916
    %v921 = vmul.f32 %v887, %v910
    %v922 = vmul.f32 %v888, %v920
    %v923 = vperm.slane %v870, 0
    %v924 = vmul.f32 %v921, %v923
    %v925 = vmul.f32 %v922, %v923
    %v926 = vperm.slane %v871, 0
    %v927 = vadd.f32 %v924, %v926
    %v928 = vadd.f32 %v925, %v926
    %v929 = vld [vmem:[%s2 + $0xa0] sm:$0xff]
    %v930 = vld [vmem:[%s2 + $0xa8] sm:$0xff]
    %v931 = vld [vmem:[%s2 + $0xb0] sm:$0xff]
    %v932 = vld [vmem:[%s2 + $0xb8] sm:$0xff]
    %v933 = vld [vmem:[%s3 + $0x5] sm:$0x1]
    %v934 = vperm.slane %v933, 0
    %v936 = vsel %vm132, %v927, 0
    %v939 = vsel %vm132, %v928, 0
    %941 = vmatpush.msra.mxu0 0.0
    %942 = vmatpush.msra.mxu0 0.0
    %943 = vmatpush.msra.mxu0 0.0
    %944 = vmatpush.msra.mxu0 0.0
    %945 = vmatpush.msra.mxu0 0.0
    %946 = vmatpush.msra.mxu0 0.0
    %947 = vmatpush.msra.mxu0 0.0
    %948 = vmatpush.msra.mxu0 0.0
    %949 = vmatpush.msra.mxu0 0.0
    %950 = vmatpush.msra.mxu0 0.0
    %951 = vmatpush.msra.mxu0 0.0
    %952 = vmatpush.msra.mxu0 0.0
    %953 = vmatpush.msra.mxu0 %v932
    %954 = vmatpush.msra.mxu0 %v931
    %955 = vmatpush.msra.mxu0 %v930
    %956 = vmatpush.msra.mxu0 %v929
    %957 = vmatmul.f32.gmra.mxu0 %v936
    %v958 = vpop.f32.mrf.mxu0
    %v959 = vadd.f32 %v934, %v958
    %960 = vmatmul.f32.gmra.mxu0 %v939
    %v961 = vpop.f32.mrf.mxu0
    %v962 = vadd.f32 %v934, %v961
    %963 = vdwg.mxu0
    %v964 = vmax.f32 %v959, 0.0
    %v965 = vmax.f32 %v962, 0.0
    %v966 = vld [vmem:[%s2 + $0xc0] sm:$0xff]
    %v967 = vld [vmem:[%s2 + $0xc8] sm:$0xff]
    %v968 = vld [vmem:[%s2 + $0xd0] sm:$0xff]
    %v969 = vld [vmem:[%s2 + $0xd8] sm:$0xff]
    %v970 = vld [vmem:[%s2 + $0xe0] sm:$0xff]
    %v971 = vld [vmem:[%s2 + $0xe8] sm:$0xff]
    %v972 = vld [vmem:[%s2 + $0xf0] sm:$0xff]
    %v973 = vld [vmem:[%s2 + $0xf8] sm:$0xff]
    %v974 = vld [vmem:[%s3 + $0x6] sm:$0x1]
    %v975 = vperm.slane %v974, 0
    %vm976 = vcmask 523264
    %v978 = vsel %vm976, %v964, 0
    %v981 = vsel %vm976, %v965, 0
    %983 = vmatpush.msra.mxu0 0.0
    %984 = vmatpush.msra.mxu0 0.0
    %985 = vmatpush.msra.mxu0 0.0
    %986 = vmatpush.msra.mxu0 0.0
    %987 = vmatpush.msra.mxu0 0.0
    %988 = vmatpush.msra.mxu0 0.0
    %989 = vmatpush.msra.mxu0 0.0
    %990 = vmatpush.msra.mxu0 0.0
    %991 = vmatpush.msra.mxu0 %v973
    %992 = vmatpush.msra.mxu0 %v972
    %993 = vmatpush.msra.mxu0 %v971
    %994 = vmatpush.msra.mxu0 %v970
    %995 = vmatpush.msra.mxu0 %v969
    %996 = vmatpush.msra.mxu0 %v968
    %997 = vmatpush.msra.mxu0 %v967
    %998 = vmatpush.msra.mxu0 %v966
    %999 = vmatmul.f32.gmra.mxu0 %v978
    %v1000 = vpop.f32.mrf.mxu0
    %v1001 = vadd.f32 %v975, %v1000
    %1002 = vmatmul.f32.gmra.mxu0 %v981
    %v1003 = vpop.f32.mrf.mxu0
    %v1004 = vadd.f32 %v975, %v1003
    %1005 = vdwg.mxu0
    %v1006 = vadd.f32 %v927, %v1001
    %v1007 = vadd.f32 %v928, %v1004
    %v1008 = vld [vmem:[%s3 + $0x9] sm:$0x1]
    %v1009 = vld [vmem:[%s3 + $0xa] sm:$0x1]
    %v1010 = vsel %vm132, %v1006, 0.0
    %1011 = vadd.xlane.f32.xlu0 %v1010
    %v1012 = vpop.xlane.xlu0 %1011
    %v1013 = vsel %vm132, %v1007, 0.0
    %1014 = vadd.xlane.f32.xlu0 %v1013
    %v1015 = vpop.xlane.xlu0 %1014
    %v1016 = vmul.f32 %v1012, %v884
    %v1017 = vmul.f32 %v1015, %v884
    %v1018 = vsub.f32 %v1006, %v1016
    %v1019 = vsub.f32 %v1007, %v1017
    %v1020 = vmul.f32 %v1018, %v1018
    %v1021 = vmul.f32 %v1019, %v1019
    %v1022 = vsel %vm132, %v1020, 0.0
    %1023 = vadd.xlane.f32.xlu0 %v1022
    %v1024 = vpop.xlane.xlu0 %1023
    %v1025 = vsel %vm132, %v1021, 0.0
    %1026 = vadd.xlane.f32.xlu0 %v1025
    %v1027 = vpop.xlane.xlu0 %1026
    %v1028 = vmul.f32 %v1024, %v884
    %v1029 = vmul.f32 %v1027, %v884
    %v1030 = vadd.f32 %v1028, 1e-05
    %v1031 = vadd.f32 %v1029, 1e-05
    %v1032 = vrsqrt.pop %v1030
    %v1033 = vmul.f32 %v1032, %v1030
    %v1034 = vmul.f32 %v1033, %v1032
    %v1035 = vmul.f32 0.5, %v1034
    %v1036 = vsub.f32 1.5, %v1035
    %v1037 = vmul.f32 %v1032, %v1036
    %vm1038 = vweird.f32 %v1030
    %vm1039 = vweird.f32 %v1032
    %vm1040 = vmor %vm1038, %vm1039
    %v1041 = vsel %vm1040, %v1032, %v1037
    %v1042 = vrsqrt.pop %v1031
    %v1043 = vmul.f32 %v1042, %v1031
    %v1044 = vmul.f32 %v1043, %v1042
    %v1045 = vmul.f32 0.5, %v1044
    %v1046 = vsub.f32 1.5, %v1045
    %v1047 = vmul.f32 %v1042, %v1046
    %vm1048 = vweird.f32 %v1031
    %vm1049 = vweird.f32 %v1042
    %vm1050 = vmor %vm1048, %vm1049
    %v1051 = vsel %vm1050, %v1042, %v1047
    %v1052 = vmul.f32 %v1018, %v1041
    %v1053 = vmul.f32 %v1019, %v1051
    %v1054 = vperm.slane %v1008, 0
    %v1055 = vmul.f32 %v1052, %v1054
    %v1056 = vmul.f32 %v1053, %v1054
    %v1057 = vperm.slane %v1009, 0
    %v1058 = vadd.f32 %v1055, %v1057
    %v1059 = vadd.f32 %v1056, %v1057
    %v1061 = vrot.slane %v1058, 1
    %v1062 = vrot.slane %v1058, 2
    %v1063 = vrot.slane %v1058, 3
    %v1064 = vrot.slane %v1058, 4
    %v1065 = vrot.slane %v1058, 5
    %v1066 = vrot.slane %v1058, 6
    %v1067 = vrot.slane %v1058, 7
    %vm1075 = vcmask 253952
    %1076 = vst.msk [vmem:[#allocation2] sm:$0x1] %vm1075, %v1058
    %1077 = vst.msk [vmem:[#allocation2 + $0x2] sm:$0x1] %vm1075, %v1061
    %1078 = vst.msk [vmem:[#allocation2 + $0x4] sm:$0x1] %vm1075, %v1062
    %1079 = vst.msk [vmem:[#allocation2 + $0x6] sm:$0x1] %vm1075, %v1063
    %1080 = vst.msk [vmem:[#allocation2 + $0x8] sm:$0x1] %vm1075, %v1064
    %1081 = vst.msk [vmem:[#allocation2 + $0xa] sm:$0x1] %vm1075, %v1065
    %1082 = vst.msk [vmem:[#allocation2 + $0xc] sm:$0x1] %vm1075, %v1066
    %1083 = vst.msk [vmem:[#allocation2 + $0xe] sm:$0x1] %vm1075, %v1067
    %v1085 = vrot.slane %v1059, 1
    %v1086 = vrot.slane %v1059, 2
    %v1087 = vrot.slane %v1059, 3
    %v1088 = vrot.slane %v1059, 4
    %v1089 = vrot.slane %v1059, 5
    %v1090 = vrot.slane %v1059, 6
    %v1091 = vrot.slane %v1059, 7
    %1099 = vst.msk [vmem:[#allocation2 + $0x1] sm:$0x1] %vm1075, %v1059
    %1100 = vst.msk [vmem:[#allocation2 + $0x3] sm:$0x1] %vm1075, %v1085
    %1101 = vst.msk [vmem:[#allocation2 + $0x5] sm:$0x1] %vm1075, %v1086
    %1102 = vst.msk [vmem:[#allocation2 + $0x7] sm:$0x1] %vm1075, %v1087
    %1103 = vst.msk [vmem:[#allocation2 + $0x9] sm:$0x1] %vm1075, %v1088
    %1104 = vst.msk [vmem:[#allocation2 + $0xb] sm:$0x1] %vm1075, %v1089
    %1105 = vst.msk [vmem:[#allocation2 + $0xd] sm:$0x1] %vm1075, %v1090
    %1106 = vst.msk [vmem:[#allocation2 + $0xf] sm:$0x1] %vm1075, %v1091
    %v1107 = vsel %vm132, %v1058, 0
    %v1109 = vsel %vm132, %v1059, 0
    %1111 = vmatpush.msra.mxu0 0.0
    %1112 = vmatpush.msra.mxu0 0.0
    %1113 = vmatpush.msra.mxu0 0.0
    %1114 = vmatpush.msra.mxu0 0.0
    %1115 = vmatpush.msra.mxu0 0.0
    %1116 = vmatpush.msra.mxu0 0.0
    %1117 = vmatpush.msra.mxu0 0.0
    %1118 = vmatpush.msra.mxu0 0.0
    %1119 = vmatpush.msra.mxu0 0.0
    %1120 = vmatpush.msra.mxu0 0.0
    %1121 = vmatpush.msra.mxu0 0.0
    %1122 = vmatpush.msra.mxu0 0.0
    %1123 = vmatpush.msra.mxu0 %v124
    %1124 = vmatpush.msra.mxu0 %v123
    %1125 = vmatpush.msra.mxu0 %v122
    %1126 = vmatpush.msra.mxu0 %v121
    %1127 = vmatmul.f32.gmra.mxu0 %v1107
    %v1128 = vpop.f32.mrf.mxu0
    %v1129 = vadd.f32 %v131, %v1128
    %1130 = vmatmul.f32.gmra.mxu0 %v1109
    %v1131 = vpop.f32.mrf.mxu0
    %v1132 = vadd.f32 %v131, %v1131
    %1133 = vdwg.mxu0
    %v1134 = vmax.f32 %v1129, 0.0
    %v1135 = vmax.f32 %v1132, 0.0
    %v1137 = vsel %vm132, %v1134, 0
    %v1140 = vsel %vm132, %v1135, 0
    %1142 = vmatpush.msra.mxu0 0.0
    %1143 = vmatpush.msra.mxu0 0.0
    %1144 = vmatpush.msra.mxu0 0.0
    %1145 = vmatpush.msra.mxu0 0.0
    %1146 = vmatpush.msra.mxu0 0.0
    %1147 = vmatpush.msra.mxu0 0.0
    %1148 = vmatpush.msra.mxu0 0.0
    %1149 = vmatpush.msra.mxu0 0.0
    %1150 = vmatpush.msra.mxu0 0.0
    %1151 = vmatpush.msra.mxu0 0.0
    %1152 = vmatpush.msra.mxu0 0.0
    %1153 = vmatpush.msra.mxu0 0.0
    %1154 = vmatpush.msra.mxu0 %v129
    %1155 = vmatpush.msra.mxu0 %v128
    %1156 = vmatpush.msra.mxu0 %v127
    %1157 = vmatpush.msra.mxu0 %v126
    %1158 = vmatmul.f32.gmra.mxu0 %v1137
    %v1159 = vpop.f32.mrf.mxu0
    %v1160 = vadd.f32 %v162, %v1159
    %1161 = vmatmul.f32.gmra.mxu0 %v1140
    %v1162 = vpop.f32.mrf.mxu0
    %v1163 = vadd.f32 %v162, %v1162
    %1164 = vdwg.mxu0
    %v1165 = vmul.f32 %v104, %v1160
    %v1166 = vmul.f32 %v119, %v1163
    %v1167 = vadd.f32 %v1058, %v1165
    %v1168 = vadd.f32 %v1059, %v1166
    %v1169 = vld [vmem:[%s2 + $0x100] sm:$0xff]
    %v1170 = vld [vmem:[%s2 + $0x108] sm:$0xff]
    %v1171 = vld [vmem:[%s2 + $0x110] sm:$0xff]
    %v1172 = vld [vmem:[%s2 + $0x118] sm:$0xff]
    %v1173 = vld [vmem:[%s3 + $0xb] sm:$0x1]
    %v1174 = vperm.slane %v1173, 0
    %v1176 = vsel %vm132, %v1167, 0
    %v1179 = vsel %vm132, %v1168, 0
    %1181 = vmatpush.msra.mxu0 0.0
    %1182 = vmatpush.msra.mxu0 0.0
    %1183 = vmatpush.msra.mxu0 0.0
    %1184 = vmatpush.msra.mxu0 0.0
    %1185 = vmatpush.msra.mxu0 0.0
    %1186 = vmatpush.msra.mxu0 0.0
    %1187 = vmatpush.msra.mxu0 0.0
    %1188 = vmatpush.msra.mxu0 0.0
    %1189 = vmatpush.msra.mxu0 0.0
    %1190 = vmatpush.msra.mxu0 0.0
    %1191 = vmatpush.msra.mxu0 0.0
    %1192 = vmatpush.msra.mxu0 0.0
    %1193 = vmatpush.msra.mxu0 %v1172
    %1194 = vmatpush.msra.mxu0 %v1171
    %1195 = vmatpush.msra.mxu0 %v1170
    %1196 = vmatpush.msra.mxu0 %v1169
    %1197 = vmatmul.f32.gmra.mxu0 %v1176
    %v1198 = vpop.f32.mrf.mxu0
    %v1199 = vadd.f32 %v1174, %v1198
    %1200 = vmatmul.f32.gmra.mxu0 %v1179
    %v1201 = vpop.f32.mrf.mxu0
    %v1202 = vadd.f32 %v1174, %v1201
    %1203 = vdwg.mxu0
    %v1204 = vld [vmem:[%s2 + $0x120] sm:$0xff]
    %v1205 = vld [vmem:[%s2 + $0x128] sm:$0xff]
    %v1206 = vld [vmem:[%s2 + $0x130] sm:$0xff]
    %v1207 = vld [vmem:[%s2 + $0x138] sm:$0xff]
    %v1208 = vld [vmem:[%s3 + $0xc] sm:$0x1]
    %v1209 = vperm.slane %v1208, 0
    %1210 = vmatpush.msra.mxu0 0.0
    %1211 = vmatpush.msra.mxu0 0.0
    %1212 = vmatpush.msra.mxu0 0.0
    %1213 = vmatpush.msra.mxu0 0.0
    %1214 = vmatpush.msra.mxu0 0.0
    %1215 = vmatpush.msra.mxu0 0.0
    %1216 = vmatpush.msra.mxu0 0.0
    %1217 = vmatpush.msra.mxu0 0.0
    %1218 = vmatpush.msra.mxu0 0.0
    %1219 = vmatpush.msra.mxu0 0.0
    %1220 = vmatpush.msra.mxu0 0.0
    %1221 = vmatpush.msra.mxu0 0.0
    %1222 = vmatpush.msra.mxu0 %v1207
    %1223 = vmatpush.msra.mxu0 %v1206
    %1224 = vmatpush.msra.mxu0 %v1205
    %1225 = vmatpush.msra.mxu0 %v1204
    %1226 = vmatmul.f32.gmra.mxu0 %v1107
    %v1227 = vpop.f32.mrf.mxu0
    %v1228 = vadd.f32 %v1209, %v1227
    %1229 = vmatmul.f32.gmra.mxu0 %v1109
    %v1230 = vpop.f32.mrf.mxu0
    %v1231 = vadd.f32 %v1209, %v1230
    %1232 = vdwg.mxu0
    %1235 = vrot.lane.b32.xlu0 %v1199, 120
    %v1236 = vpop.permute.xlu0 %1235
    %1237 = vrot.lane.b32.xlu0 %v1202, 120
    %v1238 = vpop.permute.xlu0 %1237
    %1239 = vrot.lane.b32.xlu0 %v1199, 112
    %v1240 = vpop.permute.xlu0 %1239
    %1241 = vrot.lane.b32.xlu0 %v1202, 112
    %v1242 = vpop.permute.xlu0 %1241
    %1243 = vrot.lane.b32.xlu0 %v1199, 104
    %v1244 = vpop.permute.xlu0 %1243
    %1245 = vrot.lane.b32.xlu0 %v1202, 104
    %v1246 = vpop.permute.xlu0 %1245
    %1249 = vrot.lane.b32.xlu0 %v1228, 120
    %v1250 = vpop.permute.xlu0 %1249
    %1251 = vrot.lane.b32.xlu0 %v1231, 120
    %v1252 = vpop.permute.xlu0 %1251
    %1255 = vrot.lane.b32.xlu0 %v1228, 112
    %v1256 = vpop.permute.xlu0 %1255
    %1257 = vrot.lane.b32.xlu0 %v1231, 112
    %v1258 = vpop.permute.xlu0 %1257
    %1261 = vrot.lane.b32.xlu0 %v1228, 104
    %v1262 = vpop.permute.xlu0 %1261
    %1263 = vrot.lane.b32.xlu0 %v1231, 104
    %v1264 = vpop.permute.xlu0 %1263
    %1267 = vrot.lane.b32.xlu0 %v1199, 96
    %v1268 = vpop.permute.xlu0 %1267
    %v1269 = vsel %vm296, %v1199, 0
    %v1271 = vsel %vm296, %v1268, 0
    %1273 = vmatpush.xpose.msra.mxu0 0.0
    %1274 = vmatpush.xpose.msra.mxu0 0.0
    %1275 = vmatpush.xpose.msra.mxu0 0.0
    %1276 = vmatpush.xpose.msra.mxu0 0.0
    %1277 = vmatpush.xpose.msra.mxu0 0.0
    %1278 = vmatpush.xpose.msra.mxu0 0.0
    %1279 = vmatpush.xpose.msra.mxu0 0.0
    %1280 = vmatpush.xpose.msra.mxu0 0.0
    %1281 = vmatpush.xpose.msra.mxu0 0.0
    %1282 = vmatpush.xpose.msra.mxu0 0.0
    %1283 = vmatpush.xpose.msra.mxu0 0.0
    %1284 = vmatpush.xpose.msra.mxu0 0.0
    %1285 = vmatpush.xpose.msra.mxu0 0.0
    %1286 = vmatpush.xpose.msra.mxu0 0.0
    %1287 = vmatpush.xpose.msra.mxu0 0.0
    %1288 = vmatpush.xpose.msra.mxu0 %v1271
    %1289 = vmatmul.f32.gmra.mxu0 %v1269
    %v1290 = vpop.f32.mrf.mxu0
    %v1291 = vadd.f32 0.0, %v1290
    %1292 = vdwg.mxu0
    %1293 = vrot.lane.b32.xlu0 %v1202, 96
    %v1294 = vpop.permute.xlu0 %1293
    %v1295 = vsel %vm296, %v1202, 0
    %v1297 = vsel %vm296, %v1294, 0
    %1299 = vmatpush.xpose.msra.mxu0 0.0
    %1300 = vmatpush.xpose.msra.mxu0 0.0
    %1301 = vmatpush.xpose.msra.mxu0 0.0
    %1302 = vmatpush.xpose.msra.mxu0 0.0
    %1303 = vmatpush.xpose.msra.mxu0 0.0
    %1304 = vmatpush.xpose.msra.mxu0 0.0
    %1305 = vmatpush.xpose.msra.mxu0 0.0
    %1306 = vmatpush.xpose.msra.mxu0 0.0
    %1307 = vmatpush.xpose.msra.mxu0 0.0
    %1308 = vmatpush.xpose.msra.mxu0 0.0
    %1309 = vmatpush.xpose.msra.mxu0 0.0
    %1310 = vmatpush.xpose.msra.mxu0 0.0
    %1311 = vmatpush.xpose.msra.mxu0 0.0
    %1312 = vmatpush.xpose.msra.mxu0 0.0
    %1313 = vmatpush.xpose.msra.mxu0 0.0
    %1314 = vmatpush.xpose.msra.mxu0 %v1297
    %1315 = vmatmul.f32.gmra.mxu0 %v1295
    %v1316 = vpop.f32.mrf.mxu0
    %v1317 = vadd.f32 0.0, %v1316
    %1318 = vdwg.mxu0
    %1319 = vrot.lane.b32.xlu0 %v1236, 96
    %v1320 = vpop.permute.xlu0 %1319
    %v1321 = vsel %vm296, %v1236, 0
    %v1323 = vsel %vm296, %v1320, 0
    %1325 = vmatpush.xpose.msra.mxu0 0.0
    %1326 = vmatpush.xpose.msra.mxu0 0.0
    %1327 = vmatpush.xpose.msra.mxu0 0.0
    %1328 = vmatpush.xpose.msra.mxu0 0.0
    %1329 = vmatpush.xpose.msra.mxu0 0.0
    %1330 = vmatpush.xpose.msra.mxu0 0.0
    %1331 = vmatpush.xpose.msra.mxu0 0.0
    %1332 = vmatpush.xpose.msra.mxu0 0.0
    %1333 = vmatpush.xpose.msra.mxu0 0.0
    %1334 = vmatpush.xpose.msra.mxu0 0.0
    %1335 = vmatpush.xpose.msra.mxu0 0.0
    %1336 = vmatpush.xpose.msra.mxu0 0.0
    %1337 = vmatpush.xpose.msra.mxu0 0.0
    %1338 = vmatpush.xpose.msra.mxu0 0.0
    %1339 = vmatpush.xpose.msra.mxu0 0.0
    %1340 = vmatpush.xpose.msra.mxu0 %v1323
    %1341 = vmatmul.f32.gmra.mxu0 %v1321
    %v1342 = vpop.f32.mrf.mxu0
    %v1343 = vadd.f32 0.0, %v1342
    %1344 = vdwg.mxu0
    %1345 = vrot.lane.b32.xlu0 %v1238, 96
    %v1346 = vpop.permute.xlu0 %1345
    %v1347 = vsel %vm296, %v1238, 0
    %v1349 = vsel %vm296, %v1346, 0
    %1351 = vmatpush.xpose.msra.mxu0 0.0
    %1352 = vmatpush.xpose.msra.mxu0 0.0
    %1353 = vmatpush.xpose.msra.mxu0 0.0
    %1354 = vmatpush.xpose.msra.mxu0 0.0
    %1355 = vmatpush.xpose.msra.mxu0 0.0
    %1356 = vmatpush.xpose.msra.mxu0 0.0
    %1357 = vmatpush.xpose.msra.mxu0 0.0
    %1358 = vmatpush.xpose.msra.mxu0 0.0
    %1359 = vmatpush.xpose.msra.mxu0 0.0
    %1360 = vmatpush.xpose.msra.mxu0 0.0
    %1361 = vmatpush.xpose.msra.mxu0 0.0
    %1362 = vmatpush.xpose.msra.mxu0 0.0
    %1363 = vmatpush.xpose.msra.mxu0 0.0
    %1364 = vmatpush.xpose.msra.mxu0 0.0
    %1365 = vmatpush.xpose.msra.mxu0 0.0
    %1366 = vmatpush.xpose.msra.mxu0 %v1349
    %1367 = vmatmul.f32.gmra.mxu0 %v1347
    %v1368 = vpop.f32.mrf.mxu0
    %v1369 = vadd.f32 0.0, %v1368
    %1370 = vdwg.mxu0
    %1371 = vrot.lane.b32.xlu0 %v1240, 96
    %v1372 = vpop.permute.xlu0 %1371
    %v1373 = vsel %vm296, %v1240, 0
    %v1375 = vsel %vm296, %v1372, 0
    %1377 = vmatpush.xpose.msra.mxu0 0.0
    %1378 = vmatpush.xpose.msra.mxu0 0.0
    %1379 = vmatpush.xpose.msra.mxu0 0.0
    %1380 = vmatpush.xpose.msra.mxu0 0.0
    %1381 = vmatpush.xpose.msra.mxu0 0.0
    %1382 = vmatpush.xpose.msra.mxu0 0.0
    %1383 = vmatpush.xpose.msra.mxu0 0.0
    %1384 = vmatpush.xpose.msra.mxu0 0.0
    %1385 = vmatpush.xpose.msra.mxu0 0.0
    %1386 = vmatpush.xpose.msra.mxu0 0.0
    %1387 = vmatpush.xpose.msra.mxu0 0.0
    %1388 = vmatpush.xpose.msra.mxu0 0.0
    %1389 = vmatpush.xpose.msra.mxu0 0.0
    %1390 = vmatpush.xpose.msra.mxu0 0.0
    %1391 = vmatpush.xpose.msra.mxu0 0.0
    %1392 = vmatpush.xpose.msra.mxu0 %v1375
    %1393 = vmatmul.f32.gmra.mxu0 %v1373
    %v1394 = vpop.f32.mrf.mxu0
    %v1395 = vadd.f32 0.0, %v1394
    %1396 = vdwg.mxu0
    %1397 = vrot.lane.b32.xlu0 %v1242, 96
    %v1398 = vpop.permute.xlu0 %1397
    %v1399 = vsel %vm296, %v1242, 0
    %v1401 = vsel %vm296, %v1398, 0
    %1403 = vmatpush.xpose.msra.mxu0 0.0
    %1404 = vmatpush.xpose.msra.mxu0 0.0
    %1405 = vmatpush.xpose.msra.mxu0 0.0
    %1406 = vmatpush.xpose.msra.mxu0 0.0
    %1407 = vmatpush.xpose.msra.mxu0 0.0
    %1408 = vmatpush.xpose.msra.mxu0 0.0
    %1409 = vmatpush.xpose.msra.mxu0 0.0
    %1410 = vmatpush.xpose.msra.mxu0 0.0
    %1411 = vmatpush.xpose.msra.mxu0 0.0
    %1412 = vmatpush.xpose.msra.mxu0 0.0
    %1413 = vmatpush.xpose.msra.mxu0 0.0
    %1414 = vmatpush.xpose.msra.mxu0 0.0
    %1415 = vmatpush.xpose.msra.mxu0 0.0
    %1416 = vmatpush.xpose.msra.mxu0 0.0
    %1417 = vmatpush.xpose.msra.mxu0 0.0
    %1418 = vmatpush.xpose.msra.mxu0 %v1401
    %1419 = vmatmul.f32.gmra.mxu0 %v1399
    %v1420 = vpop.f32.mrf.mxu0
    %v1421 = vadd.f32 0.0, %v1420
    %1422 = vdwg.mxu0
    %1423 = vrot.lane.b32.xlu0 %v1244, 96
    %v1424 = vpop.permute.xlu0 %1423
    %v1425 = vsel %vm296, %v1244, 0
    %v1427 = vsel %vm296, %v1424, 0
    %1429 = vmatpush.xpose.msra.mxu0 0.0
    %1430 = vmatpush.xpose.msra.mxu0 0.0
    %1431 = vmatpush.xpose.msra.mxu0 0.0
    %1432 = vmatpush.xpose.msra.mxu0 0.0
    %1433 = vmatpush.xpose.msra.mxu0 0.0
    %1434 = vmatpush.xpose.msra.mxu0 0.0
    %1435 = vmatpush.xpose.msra.mxu0 0.0
    %1436 = vmatpush.xpose.msra.mxu0 0.0
    %1437 = vmatpush.xpose.msra.mxu0 0.0
    %1438 = vmatpush.xpose.msra.mxu0 0.0
    %1439 = vmatpush.xpose.msra.mxu0 0.0
    %1440 = vmatpush.xpose.msra.mxu0 0.0
    %1441 = vmatpush.xpose.msra.mxu0 0.0
    %1442 = vmatpush.xpose.msra.mxu0 0.0
    %1443 = vmatpush.xpose.msra.mxu0 0.0
    %1444 = vmatpush.xpose.msra.mxu0 %v1427
    %1445 = vmatmul.f32.gmra.mxu0 %v1425
    %v1446 = vpop.f32.mrf.mxu0
    %v1447 = vadd.f32 0.0, %v1446
    %1448 = vdwg.mxu0
    %1449 = vrot.lane.b32.xlu0 %v1246, 96
    %v1450 = vpop.permute.xlu0 %1449
    %v1451 = vsel %vm296, %v1246, 0
    %v1453 = vsel %vm296, %v1450, 0
    %1455 = vmatpush.xpose.msra.mxu0 0.0
    %1456 = vmatpush.xpose.msra.mxu0 0.0
    %1457 = vmatpush.xpose.msra.mxu0 0.0
    %1458 = vmatpush.xpose.msra.mxu0 0.0
    %1459 = vmatpush.xpose.msra.mxu0 0.0
    %1460 = vmatpush.xpose.msra.mxu0 0.0
    %1461 = vmatpush.xpose.msra.mxu0 0.0
    %1462 = vmatpush.xpose.msra.mxu0 0.0
    %1463 = vmatpush.xpose.msra.mxu0 0.0
    %1464 = vmatpush.xpose.msra.mxu0 0.0
    %1465 = vmatpush.xpose.msra.mxu0 0.0
    %1466 = vmatpush.xpose.msra.mxu0 0.0
    %1467 = vmatpush.xpose.msra.mxu0 0.0
    %1468 = vmatpush.xpose.msra.mxu0 0.0
    %1469 = vmatpush.xpose.msra.mxu0 0.0
    %1470 = vmatpush.xpose.msra.mxu0 %v1453
    %1471 = vmatmul.f32.gmra.mxu0 %v1451
    %v1472 = vpop.f32.mrf.mxu0
    %v1473 = vadd.f32 0.0, %v1472
    %1474 = vdwg.mxu0
    %v1475 = vmul.f32 %v1291, 0.35355338
    %v1476 = vmul.f32 %v1317, 0.35355338
    %v1477 = vmul.f32 %v1343, 0.35355338
    %v1478 = vmul.f32 %v1369, 0.35355338
    %v1479 = vmul.f32 %v1395, 0.35355338
    %v1480 = vmul.f32 %v1421, 0.35355338
    %v1481 = vmul.f32 %v1447, 0.35355338
    %v1482 = vmul.f32 %v1473, 0.35355338
    %v1483 = vsel %vm296, %v1475, -inf
    %1484 = vmax.xlane.f32.xlu0 %v1483
    %v1485 = vpop.xlane.xlu0 %1484
    %v1486 = vsel %vm296, %v1476, -inf
    %1487 = vmax.xlane.f32.xlu0 %v1486
    %v1488 = vpop.xlane.xlu0 %1487
    %v1489 = vsel %vm296, %v1477, -inf
    %1490 = vmax.xlane.f32.xlu0 %v1489
    %v1491 = vpop.xlane.xlu0 %1490
    %v1492 = vsel %vm296, %v1478, -inf
    %1493 = vmax.xlane.f32.xlu0 %v1492
    %v1494 = vpop.xlane.xlu0 %1493
    %v1495 = vsel %vm296, %v1479, -inf
    %1496 = vmax.xlane.f32.xlu0 %v1495
    %v1497 = vpop.xlane.xlu0 %1496
    %v1498 = vsel %vm296, %v1480, -inf
    %1499 = vmax.xlane.f32.xlu0 %v1498
    %v1500 = vpop.xlane.xlu0 %1499
    %v1501 = vsel %vm296, %v1481, -inf
    %1502 = vmax.xlane.f32.xlu0 %v1501
    %v1503 = vpop.xlane.xlu0 %1502
    %v1504 = vsel %vm296, %v1482, -inf
    %1505 = vmax.xlane.f32.xlu0 %v1504
    %v1506 = vpop.xlane.xlu0 %1505
    %v1507 = vsub.f32 %v1475, %v1485
    %v1508 = vsub.f32 %v1476, %v1488
    %v1509 = vsub.f32 %v1477, %v1491
    %v1510 = vsub.f32 %v1478, %v1494
    %v1511 = vsub.f32 %v1479, %v1497
    %v1512 = vsub.f32 %v1480, %v1500
    %v1513 = vsub.f32 %v1481, %v1503
    %v1514 = vsub.f32 %v1482, %v1506
    %v1515 = vmul.f32 %v1507, 1.442695
    %v1516 = vpow.pop %v1515
    %v1517 = vmul.f32 %v1508, 1.442695
    %v1518 = vpow.pop %v1517
    %v1519 = vmul.f32 %v1509, 1.442695
    %v1520 = vpow.pop %v1519
    %v1521 = vmul.f32 %v1510, 1.442695
    %v1522 = vpow.pop %v1521
    %v1523 = vmul.f32 %v1511, 1.442695
    %v1524 = vpow.pop %v1523
    %v1525 = vmul.f32 %v1512, 1.442695
    %v1526 = vpow.pop %v1525
    %v1527 = vmul.f32 %v1513, 1.442695
    %v1528 = vpow.pop %v1527
    %v1529 = vmul.f32 %v1514, 1.442695
    %v1530 = vpow.pop %v1529
    %v1531 = vsel %vm296, %v1516, 0.0
    %1532 = vadd.xlane.f32.xlu0 %v1531
    %v1533 = vpop.xlane.xlu0 %1532
    %v1534 = vsel %vm296, %v1518, 0.0
    %1535 = vadd.xlane.f32.xlu0 %v1534
    %v1536 = vpop.xlane.xlu0 %1535
    %v1537 = vsel %vm296, %v1520, 0.0
    %1538 = vadd.xlane.f32.xlu0 %v1537
    %v1539 = vpop.xlane.xlu0 %1538
    %v1540 = vsel %vm296, %v1522, 0.0
    %1541 = vadd.xlane.f32.xlu0 %v1540
    %v1542 = vpop.xlane.xlu0 %1541
    %v1543 = vsel %vm296, %v1524, 0.0
    %1544 = vadd.xlane.f32.xlu0 %v1543
    %v1545 = vpop.xlane.xlu0 %1544
    %v1546 = vsel %vm296, %v1526, 0.0
    %1547 = vadd.xlane.f32.xlu0 %v1546
    %v1548 = vpop.xlane.xlu0 %1547
    %v1549 = vsel %vm296, %v1528, 0.0
    %1550 = vadd.xlane.f32.xlu0 %v1549
    %v1551 = vpop.xlane.xlu0 %1550
    %v1552 = vsel %vm296, %v1530, 0.0
    %1553 = vadd.xlane.f32.xlu0 %v1552
    %v1554 = vpop.xlane.xlu0 %1553
    %v1555 = vrcp.pop %v1533
    %v1556 = vrcp.pop %v1536
    %v1557 = vrcp.pop %v1539
    %v1558 = vrcp.pop %v1542
    %v1559 = vrcp.pop %v1545
    %v1560 = vrcp.pop %v1548
    %v1561 = vrcp.pop %v1551
    %v1562 = vrcp.pop %v1554
    %v1563 = vmul.f32 %v1516, %v1555
    %v1564 = vmul.f32 %v1518, %v1556
    %v1565 = vmul.f32 %v1520, %v1557
    %v1566 = vmul.f32 %v1522, %v1558
    %v1567 = vmul.f32 %v1524, %v1559
    %v1568 = vmul.f32 %v1526, %v1560
    %v1569 = vmul.f32 %v1528, %v1561
    %v1570 = vmul.f32 %v1530, %v1562
    %v1571 = vsel %vm296, %v1563, 0.0
    %v1572 = vsel %vm296, %v1565, 0.0
    %v1573 = vadd.f32 %v1571, %v1572
    %v1574 = vsel %vm296, %v1567, 0.0
    %v1575 = vadd.f32 %v1573, %v1574
    %v1576 = vsel %vm296, %v1569, 0.0
    %v1577 = vadd.f32 %v1575, %v1576
    %v1578 = vsel %vm296, %v1564, 0.0
    %v1579 = vsel %vm296, %v1566, 0.0
    %v1580 = vadd.f32 %v1578, %v1579
    %v1581 = vsel %vm296, %v1568, 0.0
    %v1582 = vadd.f32 %v1580, %v1581
    %v1583 = vsel %vm296, %v1570, 0.0
    %v1584 = vadd.f32 %v1582, %v1583
    %v1585 = vmul.f32 %v1577, 0.25
    %v1586 = vmul.f32 %v1584, 0.25
    %s1587 = scalar_lea.vmem [#allocation6], 16
    %1588 = vst.msk [vmem:[%s1587] sm:$0xff] %vm296, %v1585
    %1589 = vst.msk [vmem:[%s1587 + $0x8] sm:$0xff] %vm296, %v1586
    %v1591 = vsel %vm296, %v1563, 0
    %1593 = vmatpush.msra.mxu0 0.0
    %1594 = vmatpush.msra.mxu0 0.0
    %1595 = vmatpush.msra.mxu0 0.0
    %1596 = vmatpush.msra.mxu0 0.0
    %1597 = vmatpush.msra.mxu0 0.0
    %1598 = vmatpush.msra.mxu0 0.0
    %1599 = vmatpush.msra.mxu0 0.0
    %1600 = vmatpush.msra.mxu0 0.0
    %1601 = vmatpush.msra.mxu0 0.0
    %1602 = vmatpush.msra.mxu0 0.0
    %1603 = vmatpush.msra.mxu0 0.0
    %1604 = vmatpush.msra.mxu0 0.0
    %1605 = vmatpush.msra.mxu0 0.0
    %1606 = vmatpush.msra.mxu0 0.0
    %1607 = vmatpush.msra.mxu0 0.0
    %1608 = vmatpush.msra.mxu0 %v1228
    %1609 = vmatmul.f32.gmra.mxu0 %v1591
    %v1610 = vpop.f32.mrf.mxu0
    %v1611 = vadd.f32 0.0, %v1610
    %1612 = vdwg.mxu0
    %v1614 = vsel %vm296, %v1564, 0
    %1616 = vmatpush.msra.mxu0 0.0
    %1617 = vmatpush.msra.mxu0 0.0
    %1618 = vmatpush.msra.mxu0 0.0
    %1619 = vmatpush.msra.mxu0 0.0
    %1620 = vmatpush.msra.mxu0 0.0
    %1621 = vmatpush.msra.mxu0 0.0
    %1622 = vmatpush.msra.mxu0 0.0
    %1623 = vmatpush.msra.mxu0 0.0
    %1624 = vmatpush.msra.mxu0 0.0
    %1625 = vmatpush.msra.mxu0 0.0
    %1626 = vmatpush.msra.mxu0 0.0
    %1627 = vmatpush.msra.mxu0 0.0
    %1628 = vmatpush.msra.mxu0 0.0
    %1629 = vmatpush.msra.mxu0 0.0
    %1630 = vmatpush.msra.mxu0 0.0
    %1631 = vmatpush.msra.mxu0 %v1231
    %1632 = vmatmul.f32.gmra.mxu0 %v1614
    %v1633 = vpop.f32.mrf.mxu0
    %v1634 = vadd.f32 0.0, %v1633
    %1635 = vdwg.mxu0
    %v1637 = vsel %vm296, %v1565, 0
    %1639 = vmatpush.msra.mxu0 0.0
    %1640 = vmatpush.msra.mxu0 0.0
    %1641 = vmatpush.msra.mxu0 0.0
    %1642 = vmatpush.msra.mxu0 0.0
    %1643 = vmatpush.msra.mxu0 0.0
    %1644 = vmatpush.msra.mxu0 0.0
    %1645 = vmatpush.msra.mxu0 0.0
    %1646 = vmatpush.msra.mxu0 0.0
    %1647 = vmatpush.msra.mxu0 0.0
    %1648 = vmatpush.msra.mxu0 0.0
    %1649 = vmatpush.msra.mxu0 0.0
    %1650 = vmatpush.msra.mxu0 0.0
    %1651 = vmatpush.msra.mxu0 0.0
    %1652 = vmatpush.msra.mxu0 0.0
    %1653 = vmatpush.msra.mxu0 0.0
    %1654 = vmatpush.msra.mxu0 %v1250
    %1655 = vmatmul.f32.gmra.mxu0 %v1637
    %v1656 = vpop.f32.mrf.mxu0
    %v1657 = vadd.f32 0.0, %v1656
    %1658 = vdwg.mxu0
    %v1660 = vsel %vm296, %v1566, 0
    %1662 = vmatpush.msra.mxu0 0.0
    %1663 = vmatpush.msra.mxu0 0.0
    %1664 = vmatpush.msra.mxu0 0.0
    %1665 = vmatpush.msra.mxu0 0.0
    %1666 = vmatpush.msra.mxu0 0.0
    %1667 = vmatpush.msra.mxu0 0.0
    %1668 = vmatpush.msra.mxu0 0.0
    %1669 = vmatpush.msra.mxu0 0.0
    %1670 = vmatpush.msra.mxu0 0.0
    %1671 = vmatpush.msra.mxu0 0.0
    %1672 = vmatpush.msra.mxu0 0.0
    %1673 = vmatpush.msra.mxu0 0.0
    %1674 = vmatpush.msra.mxu0 0.0
    %1675 = vmatpush.msra.mxu0 0.0
    %1676 = vmatpush.msra.mxu0 0.0
    %1677 = vmatpush.msra.mxu0 %v1252
    %1678 = vmatmul.f32.gmra.mxu0 %v1660
    %v1679 = vpop.f32.mrf.mxu0
    %v1680 = vadd.f32 0.0, %v1679
    %1681 = vdwg.mxu0
    %v1683 = vsel %vm296, %v1567, 0
    %1685 = vmatpush.msra.mxu0 0.0
    %1686 = vmatpush.msra.mxu0 0.0
    %1687 = vmatpush.msra.mxu0 0.0
    %1688 = vmatpush.msra.mxu0 0.0
    %1689 = vmatpush.msra.mxu0 0.0
    %1690 = vmatpush.msra.mxu0 0.0
    %1691 = vmatpush.msra.mxu0 0.0
    %1692 = vmatpush.msra.mxu0 0.0
    %1693 = vmatpush.msra.mxu0 0.0
    %1694 = vmatpush.msra.mxu0 0.0
    %1695 = vmatpush.msra.mxu0 0.0
    %1696 = vmatpush.msra.mxu0 0.0
    %1697 = vmatpush.msra.mxu0 0.0
    %1698 = vmatpush.msra.mxu0 0.0
    %1699 = vmatpush.msra.mxu0 0.0
    %1700 = vmatpush.msra.mxu0 %v1256
    %1701 = vmatmul.f32.gmra.mxu0 %v1683
    %v1702 = vpop.f32.mrf.mxu0
    %v1703 = vadd.f32 0.0, %v1702
    %1704 = vdwg.mxu0
    %v1706 = vsel %vm296, %v1568, 0
    %1708 = vmatpush.msra.mxu0 0.0
    %1709 = vmatpush.msra.mxu0 0.0
    %1710 = vmatpush.msra.mxu0 0.0
    %1711 = vmatpush.msra.mxu0 0.0
    %1712 = vmatpush.msra.mxu0 0.0
    %1713 = vmatpush.msra.mxu0 0.0
    %1714 = vmatpush.msra.mxu0 0.0
    %1715 = vmatpush.msra.mxu0 0.0
    %1716 = vmatpush.msra.mxu0 0.0
    %1717 = vmatpush.msra.mxu0 0.0
    %1718 = vmatpush.msra.mxu0 0.0
    %1719 = vmatpush.msra.mxu0 0.0
    %1720 = vmatpush.msra.mxu0 0.0
    %1721 = vmatpush.msra.mxu0 0.0
    %1722 = vmatpush.msra.mxu0 0.0
    %1723 = vmatpush.msra.mxu0 %v1258
    %1724 = vmatmul.f32.gmra.mxu0 %v1706
    %v1725 = vpop.f32.mrf.mxu0
    %v1726 = vadd.f32 0.0, %v1725
    %1727 = vdwg.mxu0
    %v1729 = vsel %vm296, %v1569, 0
    %1731 = vmatpush.msra.mxu0 0.0
    %1732 = vmatpush.msra.mxu0 0.0
    %1733 = vmatpush.msra.mxu0 0.0
    %1734 = vmatpush.msra.mxu0 0.0
    %1735 = vmatpush.msra.mxu0 0.0
    %1736 = vmatpush.msra.mxu0 0.0
    %1737 = vmatpush.msra.mxu0 0.0
    %1738 = vmatpush.msra.mxu0 0.0
    %1739 = vmatpush.msra.mxu0 0.0
    %1740 = vmatpush.msra.mxu0 0.0
    %1741 = vmatpush.msra.mxu0 0.0
    %1742 = vmatpush.msra.mxu0 0.0
    %1743 = vmatpush.msra.mxu0 0.0
    %1744 = vmatpush.msra.mxu0 0.0
    %1745 = vmatpush.msra.mxu0 0.0
    %1746 = vmatpush.msra.mxu0 %v1262
    %1747 = vmatmul.f32.gmra.mxu0 %v1729
    %v1748 = vpop.f32.mrf.mxu0
    %v1749 = vadd.f32 0.0, %v1748
    %1750 = vdwg.mxu0
    %v1752 = vsel %vm296, %v1570, 0
    %1754 = vmatpush.msra.mxu0 0.0
    %1755 = vmatpush.msra.mxu0 0.0
    %1756 = vmatpush.msra.mxu0 0.0
    %1757 = vmatpush.msra.mxu0 0.0
    %1758 = vmatpush.msra.mxu0 0.0
    %1759 = vmatpush.msra.mxu0 0.0
    %1760 = vmatpush.msra.mxu0 0.0
    %1761 = vmatpush.msra.mxu0 0.0
    %1762 = vmatpush.msra.mxu0 0.0
    %1763 = vmatpush.msra.mxu0 0.0
    %1764 = vmatpush.msra.mxu0 0.0
    %1765 = vmatpush.msra.mxu0 0.0
    %1766 = vmatpush.msra.mxu0 0.0
    %1767 = vmatpush.msra.mxu0 0.0
    %1768 = vmatpush.msra.mxu0 0.0
    %1769 = vmatpush.msra.mxu0 %v1264
    %1770 = vmatmul.f32.gmra.mxu0 %v1752
    %v1771 = vpop.f32.mrf.mxu0
    %v1772 = vadd.f32 0.0, %v1771
    %1773 = vdwg.mxu0
    %1776 = vrot.lane.b32.xlu0 %v1657, 8
    %v1777 = vpop.permute.xlu0 %1776
    %1778 = vrot.lane.b32.xlu0 %v1680, 8
    %v1779 = vpop.permute.xlu0 %1778
    %1784 = vrot.lane.b32.xlu0 %v1703, 16
    %v1785 = vpop.permute.xlu0 %1784
    %1786 = vrot.lane.b32.xlu0 %v1726, 16
    %v1787 = vpop.permute.xlu0 %1786
    %1792 = vrot.lane.b32.xlu0 %v1749, 24
    %v1793 = vpop.permute.xlu0 %1792
    %1794 = vrot.lane.b32.xlu0 %v1772, 24
    %v1795 = vpop.permute.xlu0 %1794
    %v1798 = vsel %vm296, %v1611, %v1777
    %v1799 = vsel %vm296, %v1634, %v1779
    %v1800 = vsel %vm827, %v1798, %v1785
    %v1801 = vsel %vm827, %v1799, %v1787
    %v1802 = vsel %vm830, %v1800, %v1793
    %v1803 = vsel %vm830, %v1801, %v1795
    %v1804 = vld [vmem:[%s2 + $0x140] sm:$0xff]
    %v1805 = vld [vmem:[%s2 + $0x148] sm:$0xff]
    %v1806 = vld [vmem:[%s2 + $0x150] sm:$0xff]
    %v1807 = vld [vmem:[%s2 + $0x158] sm:$0xff]
    %v1808 = vld [vmem:[%s3 + $0xd] sm:$0x1]
    %v1809 = vperm.slane %v1808, 0
    %v1811 = vsel %vm132, %v1802, 0
    %v1814 = vsel %vm132, %v1803, 0
    %1816 = vmatpush.msra.mxu0 0.0
    %1817 = vmatpush.msra.mxu0 0.0
    %1818 = vmatpush.msra.mxu0 0.0
    %1819 = vmatpush.msra.mxu0 0.0
    %1820 = vmatpush.msra.mxu0 0.0
    %1821 = vmatpush.msra.mxu0 0.0
    %1822 = vmatpush.msra.mxu0 0.0
    %1823 = vmatpush.msra.mxu0 0.0
    %1824 = vmatpush.msra.mxu0 0.0
    %1825 = vmatpush.msra.mxu0 0.0
    %1826 = vmatpush.msra.mxu0 0.0
    %1827 = vmatpush.msra.mxu0 0.0
    %1828 = vmatpush.msra.mxu0 %v1807
    %1829 = vmatpush.msra.mxu0 %v1806
    %1830 = vmatpush.msra.mxu0 %v1805
    %1831 = vmatpush.msra.mxu0 %v1804
    %1832 = vmatmul.f32.gmra.mxu0 %v1811
    %v1833 = vpop.f32.mrf.mxu0
    %v1834 = vadd.f32 %v1809, %v1833
    %1835 = vmatmul.f32.gmra.mxu0 %v1814
    %v1836 = vpop.f32.mrf.mxu0
    %v1837 = vadd.f32 %v1809, %v1836
    %1838 = vdwg.mxu0
    %v1839 = vadd.f32 %v1058, %v1834
    %v1840 = vadd.f32 %v1059, %v1837
    %v1841 = vld [vmem:[%s3 + $0x10] sm:$0x1]
    %v1842 = vld [vmem:[%s3 + $0x11] sm:$0x1]
    %v1843 = vsel %vm132, %v1839, 0.0
    %1844 = vadd.xlane.f32.xlu0 %v1843
    %v1845 = vpop.xlane.xlu0 %1844
    %v1846 = vsel %vm132, %v1840, 0.0
    %1847 = vadd.xlane.f32.xlu0 %v1846
    %v1848 = vpop.xlane.xlu0 %1847
    %v1849 = vmul.f32 %v1845, %v884
    %v1850 = vmul.f32 %v1848, %v884
    %v1851 = vsub.f32 %v1839, %v1849
    %v1852 = vsub.f32 %v1840, %v1850
    %v1853 = vmul.f32 %v1851, %v1851
    %v1854 = vmul.f32 %v1852, %v1852
    %v1855 = vsel %vm132, %v1853, 0.0
    %1856 = vadd.xlane.f32.xlu0 %v1855
    %v1857 = vpop.xlane.xlu0 %1856
    %v1858 = vsel %vm132, %v1854, 0.0
    %1859 = vadd.xlane.f32.xlu0 %v1858
    %v1860 = vpop.xlane.xlu0 %1859
    %v1861 = vmul.f32 %v1857, %v884
    %v1862 = vmul.f32 %v1860, %v884
    %v1863 = vadd.f32 %v1861, 1e-05
    %v1864 = vadd.f32 %v1862, 1e-05
    %v1865 = vrsqrt.pop %v1863
    %v1866 = vmul.f32 %v1865, %v1863
    %v1867 = vmul.f32 %v1866, %v1865
    %v1868 = vmul.f32 0.5, %v1867
    %v1869 = vsub.f32 1.5, %v1868
    %v1870 = vmul.f32 %v1865, %v1869
    %vm1871 = vweird.f32 %v1863
    %vm1872 = vweird.f32 %v1865
    %vm1873 = vmor %vm1871, %vm1872
    %v1874 = vsel %vm1873, %v1865, %v1870
    %v1875 = vrsqrt.pop %v1864
    %v1876 = vmul.f32 %v1875, %v1864
    %v1877 = vmul.f32 %v1876, %v1875
    %v1878 = vmul.f32 0.5, %v1877
    %v1879 = vsub.f32 1.5, %v1878
    %v1880 = vmul.f32 %v1875, %v1879
    %vm1881 = vweird.f32 %v1864
    %vm1882 = vweird.f32 %v1875
    %vm1883 = vmor %vm1881, %vm1882
    %v1884 = vsel %vm1883, %v1875, %v1880
    %v1885 = vmul.f32 %v1851, %v1874
    %v1886 = vmul.f32 %v1852, %v1884
    %v1887 = vperm.slane %v1841, 0
    %v1888 = vmul.f32 %v1885, %v1887
    %v1889 = vmul.f32 %v1886, %v1887
    %v1890 = vperm.slane %v1842, 0
    %v1891 = vadd.f32 %v1888, %v1890
    %v1892 = vadd.f32 %v1889, %v1890
    %v1893 = vld [vmem:[%s2 + $0x160] sm:$0xff]
    %v1894 = vld [vmem:[%s2 + $0x168] sm:$0xff]
    %v1895 = vld [vmem:[%s2 + $0x170] sm:$0xff]
    %v1896 = vld [vmem:[%s2 + $0x178] sm:$0xff]
    %v1897 = vld [vmem:[%s3 + $0xe] sm:$0x1]
    %v1898 = vperm.slane %v1897, 0
    %v1900 = vsel %vm132, %v1891, 0
    %v1903 = vsel %vm132, %v1892, 0
    %1905 = vmatpush.msra.mxu0 0.0
    %1906 = vmatpush.msra.mxu0 0.0
    %1907 = vmatpush.msra.mxu0 0.0
    %1908 = vmatpush.msra.mxu0 0.0
    %1909 = vmatpush.msra.mxu0 0.0
    %1910 = vmatpush.msra.mxu0 0.0
    %1911 = vmatpush.msra.mxu0 0.0
    %1912 = vmatpush.msra.mxu0 0.0
    %1913 = vmatpush.msra.mxu0 0.0
    %1914 = vmatpush.msra.mxu0 0.0
    %1915 = vmatpush.msra.mxu0 0.0
    %1916 = vmatpush.msra.mxu0 0.0
    %1917 = vmatpush.msra.mxu0 %v1896
    %1918 = vmatpush.msra.mxu0 %v1895
    %1919 = vmatpush.msra.mxu0 %v1894
    %1920 = vmatpush.msra.mxu0 %v1893
    %1921 = vmatmul.f32.gmra.mxu0 %v1900
    %v1922 = vpop.f32.mrf.mxu0
    %v1923 = vadd.f32 %v1898, %v1922
    %1924 = vmatmul.f32.gmra.mxu0 %v1903
    %v1925 = vpop.f32.mrf.mxu0
    %v1926 = vadd.f32 %v1898, %v1925
    %1927 = vdwg.mxu0
    %v1928 = vmax.f32 %v1923, 0.0
    %v1929 = vmax.f32 %v1926, 0.0
    %v1930 = vld [vmem:[%s2 + $0x180] sm:$0xff]
    %v1931 = vld [vmem:[%s2 + $0x188] sm:$0xff]
    %v1932 = vld [vmem:[%s2 + $0x190] sm:$0xff]
    %v1933 = vld [vmem:[%s2 + $0x198] sm:$0xff]
    %v1934 = vld [vmem:[%s2 + $0x1a0] sm:$0xff]
    %v1935 = vld [vmem:[%s2 + $0x1a8] sm:$0xff]
    %v1936 = vld [vmem:[%s2 + $0x1b0] sm:$0xff]
    %v1937 = vld [vmem:[%s2 + $0x1b8] sm:$0xff]
    %v1938 = vld [vmem:[%s3 + $0xf] sm:$0x1]
    %v1939 = vperm.slane %v1938, 0
    %v1941 = vsel %vm976, %v1928, 0
    %v1944 = vsel %vm976, %v1929, 0
    %1946 = vmatpush.msra.mxu0 0.0
    %1947 = vmatpush.msra.mxu0 0.0
    %1948 = vmatpush.msra.mxu0 0.0
    %1949 = vmatpush.msra.mxu0 0.0
    %1950 = vmatpush.msra.mxu0 0.0
    %1951 = vmatpush.msra.mxu0 0.0
    %1952 = vmatpush.msra.mxu0 0.0
    %1953 = vmatpush.msra.mxu0 0.0
    %1954 = vmatpush.msra.mxu0 %v1937
    %1955 = vmatpush.msra.mxu0 %v1936
    %1956 = vmatpush.msra.mxu0 %v1935
    %1957 = vmatpush.msra.mxu0 %v1934
    %1958 = vmatpush.msra.mxu0 %v1933
    %1959 = vmatpush.msra.mxu0 %v1932
    %1960 = vmatpush.msra.mxu0 %v1931
    %1961 = vmatpush.msra.mxu0 %v1930
    %1962 = vmatmul.f32.gmra.mxu0 %v1941
    %v1963 = vpop.f32.mrf.mxu0
    %v1964 = vadd.f32 %v1939, %v1963
    %1965 = vmatmul.f32.gmra.mxu0 %v1944
    %v1966 = vpop.f32.mrf.mxu0
    %v1967 = vadd.f32 %v1939, %v1966
    %1968 = vdwg.mxu0
    %v1969 = vadd.f32 %v1891, %v1964
    %v1970 = vadd.f32 %v1892, %v1967
    %v1971 = vld [vmem:[%s3 + $0x12] sm:$0x1]
    %v1972 = vld [vmem:[%s3 + $0x13] sm:$0x1]
    %v1973 = vsel %vm132, %v1969, 0.0
    %1974 = vadd.xlane.f32.xlu0 %v1973
    %v1975 = vpop.xlane.xlu0 %1974
    %v1976 = vsel %vm132, %v1970, 0.0
    %1977 = vadd.xlane.f32.xlu0 %v1976
    %v1978 = vpop.xlane.xlu0 %1977
    %v1979 = vmul.f32 %v1975, %v884
    %v1980 = vmul.f32 %v1978, %v884
    %v1981 = vsub.f32 %v1969, %v1979
    %v1982 = vsub.f32 %v1970, %v1980
    %v1983 = vmul.f32 %v1981, %v1981
    %v1984 = vmul.f32 %v1982, %v1982
    %v1985 = vsel %vm132, %v1983, 0.0
    %1986 = vadd.xlane.f32.xlu0 %v1985
    %v1987 = vpop.xlane.xlu0 %1986
    %v1988 = vsel %vm132, %v1984, 0.0
    %1989 = vadd.xlane.f32.xlu0 %v1988
    %v1990 = vpop.xlane.xlu0 %1989
    %v1991 = vmul.f32 %v1987, %v884
    %v1992 = vmul.f32 %v1990, %v884
    %v1993 = vadd.f32 %v1991, 1e-05
    %v1994 = vadd.f32 %v1992, 1e-05
    %v1995 = vrsqrt.pop %v1993
    %v1996 = vmul.f32 %v1995, %v1993
    %v1997 = vmul.f32 %v1996, %v1995
    %v1998 = vmul.f32 0.5, %v1997
    %v1999 = vsub.f32 1.5, %v1998
    %v2000 = vmul.f32 %v1995, %v1999
    %vm2001 = vweird.f32 %v1993
    %vm2002 = vweird.f32 %v1995
    %vm2003 = vmor %vm2001, %vm2002
    %v2004 = vsel %vm2003, %v1995, %v2000
    %v2005 = vrsqrt.pop %v1994
    %v2006 = vmul.f32 %v2005, %v1994
    %v2007 = vmul.f32 %v2006, %v2005
    %v2008 = vmul.f32 0.5, %v2007
    %v2009 = vsub.f32 1.5, %v2008
    %v2010 = vmul.f32 %v2005, %v2009
    %vm2011 = vweird.f32 %v1994
    %vm2012 = vweird.f32 %v2005
    %vm2013 = vmor %vm2011, %vm2012
    %v2014 = vsel %vm2013, %v2005, %v2010
    %v2015 = vmul.f32 %v1981, %v2004
    %v2016 = vmul.f32 %v1982, %v2014
    %v2017 = vperm.slane %v1971, 0
    %v2018 = vmul.f32 %v2015, %v2017
    %v2019 = vmul.f32 %v2016, %v2017
    %v2020 = vperm.slane %v1972, 0
    %v2021 = vadd.f32 %v2018, %v2020
    %v2022 = vadd.f32 %v2019, %v2020
    %v2024 = vrot.slane %v2021, 1
    %v2025 = vrot.slane %v2021, 2
    %v2026 = vrot.slane %v2021, 3
    %v2027 = vrot.slane %v2021, 4
    %v2028 = vrot.slane %v2021, 5
    %v2029 = vrot.slane %v2021, 6
    %v2030 = vrot.slane %v2021, 7
    %2038 = vst.msk [vmem:[#allocation4] sm:$0x1] %vm1075, %v2021
    %2039 = vst.msk [vmem:[#allocation4 + $0x2] sm:$0x1] %vm1075, %v2024
    %2040 = vst.msk [vmem:[#allocation4 + $0x4] sm:$0x1] %vm1075, %v2025
    %2041 = vst.msk [vmem:[#allocation4 + $0x6] sm:$0x1] %vm1075, %v2026
    %2042 = vst.msk [vmem:[#allocation4 + $0x8] sm:$0x1] %vm1075, %v2027
    %2043 = vst.msk [vmem:[#allocation4 + $0xa] sm:$0x1] %vm1075, %v2028
    %2044 = vst.msk [vmem:[#allocation4 + $0xc] sm:$0x1] %vm1075, %v2029
    %2045 = vst.msk [vmem:[#allocation4 + $0xe] sm:$0x1] %vm1075, %v2030
    %v2047 = vrot.slane %v2022, 1
    %v2048 = vrot.slane %v2022, 2
    %v2049 = vrot.slane %v2022, 3
    %v2050 = vrot.slane %v2022, 4
    %v2051 = vrot.slane %v2022, 5
    %v2052 = vrot.slane %v2022, 6
    %v2053 = vrot.slane %v2022, 7
    %2061 = vst.msk [vmem:[#allocation4 + $0x1] sm:$0x1] %vm1075, %v2022
    %2062 = vst.msk [vmem:[#allocation4 + $0x3] sm:$0x1] %vm1075, %v2047
    %2063 = vst.msk [vmem:[#allocation4 + $0x5] sm:$0x1] %vm1075, %v2048
    %2064 = vst.msk [vmem:[#allocation4 + $0x7] sm:$0x1] %vm1075, %v2049
    %2065 = vst.msk [vmem:[#allocation4 + $0x9] sm:$0x1] %vm1075, %v2050
    %2066 = vst.msk [vmem:[#allocation4 + $0xb] sm:$0x1] %vm1075, %v2051
    %2067 = vst.msk [vmem:[#allocation4 + $0xd] sm:$0x1] %vm1075, %v2052
    %2068 = vst.msk [vmem:[#allocation4 + $0xf] sm:$0x1] %vm1075, %v2053
    // Predicated region
    $region18: #{transformer_encoder_forward.1} parent=1 // pred_check
      _
    $region19: #{transformer_encoder_forward.1} parent=1 // pred_check_branch
      %2070 = sbr.rel (0) target = $region21
    $region20: #{transformer_encoder_forward.1} parent=1 // pred_region
      %2072 = vsyncadd [#allocation3], 0
      %s2073 = sshll.u32 [#allocation2], 4
      %s2074 = int_to_ptr.vmem [resolvable:$true] %s2073
      %s2075 = sshll.u32 %s4, 4
      %s2076 = int_to_ptr.hbm [resolvable:$true] %s2075
      %2081 = dma.vmem_to_hbm [thread:$0]  %s2074, 256, %s2076, [#allocation3], 32, 32, 2
    $region21: #{transformer_encoder_forward.1} parent=1 // pred_fallthru
      _
    // Predicated region
    $region22: #{transformer_encoder_forward.1} parent=1 // pred_check
      _
    $region23: #{transformer_encoder_forward.1} parent=1 // pred_check_branch
      %2083 = sbr.rel (0) target = $region25
    $region24: #{transformer_encoder_forward.1} parent=1 // pred_region
      %2085 = vsyncadd [#allocation5], 0
      %s2086 = sshll.u32 [#allocation4], 4
      %s2087 = int_to_ptr.vmem [resolvable:$true] %s2086
      %s2088 = sshll.u32 %s5, 4
      %s2089 = int_to_ptr.hbm [resolvable:$true] %s2088
      %2094 = dma.vmem_to_hbm [thread:$0]  %s2087, 256, %s2089, [#allocation5], 32, 32, 2
    $region25: #{transformer_encoder_forward.1} parent=1 // pred_fallthru
      _
    // Predicated region
    $region26: #{transformer_encoder_forward.1} parent=1 // pred_check
      _
    $region27: #{transformer_encoder_forward.1} parent=1 // pred_check_branch
      %2096 = sbr.rel (0) target = $region29
    $region28: #{transformer_encoder_forward.1} parent=1 // pred_region
      %2098 = vsyncadd [#allocation5], 0
      %s2099 = sshll.u32 [#allocation6], 4
      %s2100 = int_to_ptr.vmem [resolvable:$true] %s2099
      %s2101 = sshll.u32 %s6, 4
      %s2102 = int_to_ptr.hbm [resolvable:$true] %s2101
      %2107 = dma.vmem_to_hbm [thread:$0]  %s2100, 512, %s2102, [#allocation5], 128, 128, 8
    $region29: #{transformer_encoder_forward.1} parent=1 // pred_fallthru
      _
    // Predicated region
    $region30: #{transformer_encoder_forward.1} parent=1 // pred_check
      _
    $region31: #{transformer_encoder_forward.1} parent=1 // pred_check_branch
      %2109 = sbr.rel (0) target = $region33
    $region32: #{transformer_encoder_forward.1} parent=1 // pred_region
      %2111 = dma.done [#allocation3], 256
    $region33: #{transformer_encoder_forward.1} parent=1 // pred_fallthru
      _
    // Predicated region
    $region34: #{transformer_encoder_forward.1} parent=1 // pred_check
      _
    $region35: #{transformer_encoder_forward.1} parent=1 // pred_check_branch
      %2113 = sbr.rel (0) target = $region37
    $region36: #{transformer_encoder_forward.1} parent=1 // pred_region
      %2115 = dma.done [#allocation5], 256
    $region37: #{transformer_encoder_forward.1} parent=1 // pred_fallthru
      _
    // Predicated region
    $region38: #{transformer_encoder_forward.1} parent=1 // pred_check
      _
    $region39: #{transformer_encoder_forward.1} parent=1 // pred_check_branch
      %2117 = sbr.rel (0) target = $region41
    $region40: #{transformer_encoder_forward.1} parent=1 // pred_region
      %2119 = dma.done [#allocation5], 512
    $region41: #{transformer_encoder_forward.1} parent=1 // pred_fallthru
      _
    %2120 = vsyncpa [#allocation3], 1
    %2121 = vsyncpa [#allocation5], 1

</llo_original>
